<compile_context>
chip_gen: v7x
topology: tpu7x:2x2x1
jax: 0.10.0
libtpu: 0.0.40
codegen_flags: <defaults>
</compile_context>

<pallas_src>
import numpy as np
import jax
import jax.numpy as jnp
from jax.experimental import pallas as pl
from jax.experimental.pallas import tpu as pltpu

QUBITS = 4                   # kernel_size ** 2
DIM = 2 ** QUBITS            # 16 basis states
NPOS = 16                    # 4 x 4 quantum-conv output positions per image
V1_LEN = NPOS * 16           # 256 conv1 outputs per image
V2_LEN = NPOS * 4            # 64  conv2 outputs per image
QOUT = NPOS * DIM            # 256 quantum probabilities per image
NCLASS = 10
NCLASS_PAD = 128             # lane-dense padded class dimension
MAX_TB = 256                 # max images per grid step (fits v5e/v6e/v7x VMEM)

# ----------------------------------------------------------------------------
# Static quantum-circuit matrices (deterministic setup glue, numpy).
# ----------------------------------------------------------------------------
_I2 = np.eye(2)
_X = np.array([[0.0, 1.0], [1.0, 0.0]])
_H = np.array([[1.0, 1.0], [1.0, -1.0]]) / np.sqrt(2.0)


def _get_cnot(control, target, qubits):
    # Faithful port of QuantumConv2d.get_CNOT (1-based qubit indices).
    swap = True
    if control > target:
        swap = False
        control, target = target, control
    diff = target - control
    if diff > 1:
        scaler = np.eye(2 ** (diff - 1))
        upper = np.kron(scaler, _I2)
        lower = np.kron(scaler, _X)
    else:
        upper = _I2
        lower = _X
    u = (np.kron(np.array([[1.0, 0.0], [0.0, 0.0]]), upper)
         + np.kron(np.array([[0.0, 0.0], [0.0, 1.0]]), lower))
    if swap:
        s = _H
        for _ in range(1, diff + 1):
            s = np.kron(s, _H)
        u = s @ u @ s
    if qubits > diff + 1:
        before = int(control - 1)
        after = int(qubits - target)
        u = np.kron(np.eye(2 ** after), np.kron(u, np.eye(2 ** before)))
    return u


def _get_cnot_ring(num_qubits):
    u = _get_cnot(1, 2, num_qubits)
    for i in range(2, num_qubits):
        u = _get_cnot(i, i + 1, num_qubits) @ u
    u = _get_cnot(num_qubits, 1, num_qubits) @ u
    return np.rint(u)  # clean 0/1 permutation matrix


def _get_rx(rotations):
    def rx(theta):
        c, s = np.cos(theta / 2.0), np.sin(theta / 2.0)
        return np.array([[c, -1j * s], [-1j * s, c]], dtype=np.complex128)

    u = rx(rotations[0])
    for i in range(1, len(rotations)):
        u = np.kron(rx(rotations[i]), u)
    return u


def _sign_matrix(qubits):
    # Same as get_static_RZ: column q = (2 * bit_q(k) - 1), LSB-first columns.
    ks = np.arange(2 ** qubits)
    bits = (ks[:, None] >> np.arange(qubits)[None, :]) & 1
    return (2.0 * bits - 1.0).astype(np.float64)                 # (16, 4)


# ----------------------------------------------------------------------------
# Fold all layer weights / regroupings into the constant operand matrices.
# ----------------------------------------------------------------------------
def build_operands(params):
    w1 = np.asarray(params["w1"], np.float64).reshape(-1)        # conv1 2x2, row-major
    w2 = np.asarray(params["w2"], np.float64).reshape(-1)        # conv2 2x2, row-major
    b1 = float(np.asarray(params["b1"]).reshape(()))
    b2 = float(np.asarray(params["b2"]).reshape(()))
    qw = np.asarray(params["qw"], np.float64).reshape(-1)        # RX angles = weight.flatten()
    wfc = np.asarray(params["wfc"], np.float64)                  # (64, 10)
    bfc = np.asarray(params["bfc"], np.float64).reshape(-1)      # (10,)

    # conv2 folded: column m = 4P + a sums conv1 outputs 4m + b with weight w2[b].
    W2 = np.zeros((V1_LEN, V2_LEN), np.float64)
    ms = np.arange(V2_LEN)
    for e in range(4):
        W2[4 * ms + e, ms] = w2[e]

    # Quantum layer: per position P the 4-vector x = v2[4P:4P+4].
    #   u_k = sum_q S[k,q] x_q, r = sum_q x_q^2,
    #   phase_k = 0.5 u_k - 0.25 u_k^2 + 0.25 r   (joint RZ + RZZ diagonal)
    S = _sign_matrix(QUBITS)                                     # (16, 4)
    SU = np.zeros((V2_LEN, QOUT), np.float64)
    RS = np.zeros((V2_LEN, QOUT), np.float64)
    for p in range(NPOS):
        SU[4 * p:4 * p + 4, DIM * p:DIM * p + DIM] = S.T
        RS[4 * p:4 * p + 4, DIM * p:DIM * p + DIM] = 1.0
    SUcat = np.concatenate([SU, SU], axis=1)                     # (64, 512)
    RScat = np.concatenate([RS, RS], axis=1)                     # (64, 512)
    # [phase + pi/2 | phase] so that 0.25*sin(.) = [Re | Im] of the state.
    off = np.concatenate([np.full((1, QOUT), np.pi / 2.0),
                          np.zeros((1, QOUT))], axis=1)          # (1, 512)

    # RX layer + CNOT ring folded into one complex matrix M; block-diagonal over
    # the 16 positions, complex product expressed as [vr|vi] @ Mblk.
    M = _get_cnot_ring(QUBITS) @ _get_rx(qw)                     # (16, 16) complex
    mrt, mit = np.real(M).T, np.imag(M).T
    BDr = np.zeros((QOUT, QOUT), np.float64)
    BDi = np.zeros((QOUT, QOUT), np.float64)
    for p in range(NPOS):
        sl = slice(DIM * p, DIM * p + DIM)
        BDr[sl, sl] = mrt
        BDi[sl, sl] = mit
    Mblk = np.block([[BDr, BDi], [-BDi, BDr]])                   # (512, 512)

    # fc1 folded with the channel/position regroup, padded to 128 lane-dense
    # classes; pad lanes get a -1e9 bias so exp() kills them in the softmax.
    # feature 16*chan + P  <-  probability column 16*P + chan  (chan < 4).
    # TODO(synk): reference assigns a 16-state distribution to a 4-channel slot
    # (shape mismatch in the original module); we keep the first kernel_size**2
    # basis-state probabilities so fc1(64 -> 10) is consistent.
    WF = np.zeros((QOUT, NCLASS_PAD), np.float64)
    for p in range(NPOS):
        for ch in range(4):
            WF[DIM * p + ch, :NCLASS] = wfc[NPOS * ch + p, :]
    BF = np.full((1, NCLASS_PAD), -1e9, np.float64)
    BF[0, :NCLASS] = bfc

    f32 = lambda a: jnp.asarray(a, dtype=jnp.float32)
    bf16 = lambda a: jnp.asarray(a, dtype=jnp.bfloat16)
    return {
        "w2big": f32(W2),
        "sucat": f32(SUcat), "rscat": f32(RScat), "off": f32(off),
        "mblk": bf16(Mblk),                                      # dominant matmul -> bf16
        "wfcf": f32(WF), "bfc": f32(BF),
        # SMEM scalars: [w1_00, w1_01, w1_10, w1_11, b1, b2]
        "scal": f32(np.concatenate([w1, np.array([b1, b2])])),
    }


# ----------------------------------------------------------------------------
# Host-side input layout: padded 32x32 image -> (4, B, 256) pixel-major blocks.
# Leading axis c = pixel inside the conv1 2x2 patch (row-major, matches w1);
# trailing 256-axis k = 16*P + 4*a + b.
# ----------------------------------------------------------------------------
def _to_pixel_major_blocks(x):
    b = x.shape[0]
    xp = jnp.pad(x[:, 0], ((0, 0), (2, 2), (2, 2)))              # (B, 32, 32)
    # space-to-depth by 8: one 8x8 block per quantum-conv output position P=(I,J).
    xb = xp.reshape(b, 4, 8, 4, 8).transpose(0, 1, 3, 2, 4)      # (B, I, J, u, v)
    # u = 4*ar + 2*br + cr, v = 4*ac + 2*bc + cc
    xb = xb.reshape(b, 4, 4, 2, 2, 2, 2, 2, 2)                   # (B,I,J,ar,br,cr,ac,bc,cc)
    xb = xb.transpose(5, 8, 0, 1, 2, 3, 6, 4, 7)                 # (cr,cc,B,I,J,ar,ac,br,bc)
    return xb.reshape(4, b, V1_LEN)                              # (4, B, 256)


# ----------------------------------------------------------------------------
# The single fused Pallas kernel (TB images per grid step).
# ----------------------------------------------------------------------------
def _fused_forward_kernel(x_ref, w2_ref, su_ref, rs_ref, off_ref,
                          mblk_ref, wfc_ref, bfc_ref, sc_ref, o_ref):
    # conv1 (2x2, stride 2, pad 2) + relu as 4 VPU broadcast-FMAs (the folded
    # W1 matmul was 99.6% zeros -> removed per perf review).
    v1 = jnp.maximum(
        sc_ref[0] * x_ref[0] + sc_ref[1] * x_ref[1]
        + sc_ref[2] * x_ref[2] + sc_ref[3] * x_ref[3] + sc_ref[4], 0.0)      # (TB, 256)

    # conv2 (2x2, stride 2) + relu, folded patch-regroup matmul (tiny, f32).
    v2 = jnp.maximum(
        jnp.dot(v1, w2_ref[...], preferred_element_type=jnp.float32)
        + sc_ref[5], 0.0)                                                    # (TB, 64)

    # QuantumConv2d(2,2): diagonal RZ+RZZ phase on the uniform H|0> state, then
    # (CNOT_ring @ RX), block-diagonally over the 16 positions.
    u = jnp.dot(v2, su_ref[...], preferred_element_type=jnp.float32)        # (TB, 512)
    r = jnp.dot(v2 * v2, rs_ref[...], preferred_element_type=jnp.float32)   # (TB, 512)
    phase = 0.5 * u - 0.25 * (u * u) + 0.25 * r + off_ref[...]
    # = [0.25*cos(phase) | 0.25*sin(phase)] = [Re | Im] of the post-diag state.
    v_ri = (0.25 * jnp.sin(phase)).astype(jnp.bfloat16)
    out = jnp.dot(v_ri, mblk_ref[...], preferred_element_type=jnp.float32)  # (TB, 512)
    out_r = out[:, :QOUT]
    out_i = out[:, QOUT:]
    probs = out_r * out_r + out_i * out_i                                   # (TB, 256)
    # (reference applies relu to probabilities; identity since probs >= 0)

    # fc1 (channel-select / reorder folded in, lane-padded to 128) + softmax.
    logits = (jnp.dot(probs, wfc_ref[...], preferred_element_type=jnp.float32)
              + bfc_ref[...])                                               # (TB, 128)
    z = logits - jnp.max(logits, axis=-1, keepdims=True)
    e = jnp.exp(z)                                     # pad lanes -> exp(-1e9) = 0
    o_ref[...] = (e / jnp.sum(e, axis=-1, keepdims=True)).astype(o_ref.dtype)


def quantum_conv_net_forward(x, operands, max_tb=MAX_TB):
    b = x.shape[0]
    xb = _to_pixel_major_blocks(x)                               # (4, B, 256)

    # Batch tile: multiple of 8 sublanes, capped so VMEM stays comfortable on
    # all generations; pad the batch up to a multiple of the tile.
    tb = min(max_tb, ((b + 7) // 8) * 8)
    b_pad = ((b + tb - 1) // tb) * tb
    if b_pad != b:
        xb = jnp.pad(xb, ((0, 0), (0, b_pad - b), (0, 0)))
    steps = b_pad // tb

    # Advisory cost estimate so XLA schedules the host-side layout transpose /
    # downstream ops around the kernel sensibly.
    flops_per_img = (2 * (V1_LEN * V2_LEN + 2 * V2_LEN * 2 * QOUT
                          + (2 * QOUT) * (2 * QOUT) + QOUT * NCLASS_PAD)
                     + 8 * V1_LEN)
    const_bytes = sum(int(np.prod(operands[k].shape)) * operands[k].dtype.itemsize
                      for k in ("w2big", "sucat", "rscat", "off", "mblk", "wfcf", "bfc"))
    cost = pl.CostEstimate(
        flops=int(b_pad * flops_per_img),
        transcendentals=int(b_pad * (2 * QOUT + NCLASS_PAD)),
        bytes_accessed=int(b_pad * (4 * V1_LEN + NCLASS_PAD) * 4 + steps * const_bytes))

    out = pl.pallas_call(
        _fused_forward_kernel,
        out_shape=jax.ShapeDtypeStruct((b_pad, NCLASS_PAD), jnp.float32),
        grid=(steps,),
        in_specs=[
            pl.BlockSpec((4, tb, V1_LEN), lambda i: (0, i, 0)),        # x (pixel-major)
            pl.BlockSpec((V1_LEN, V2_LEN), lambda i: (0, 0)),          # conv2 folded
            pl.BlockSpec((V2_LEN, 2 * QOUT), lambda i: (0, 0)),        # RZ sign spread
            pl.BlockSpec((V2_LEN, 2 * QOUT), lambda i: (0, 0)),        # |x|^2 spread
            pl.BlockSpec((1, 2 * QOUT), lambda i: (0, 0)),             # +pi/2 offset
            pl.BlockSpec((2 * QOUT, 2 * QOUT), lambda i: (0, 0)),      # complex blockdiag (bf16)
            pl.BlockSpec((QOUT, NCLASS_PAD), lambda i: (0, 0)),        # fc1 folded (lane-padded)
            pl.BlockSpec((1, NCLASS_PAD), lambda i: (0, 0)),           # fc1 bias (pad = -1e9)
            pl.BlockSpec(memory_space=pltpu.MemorySpace.SMEM),         # [w1(4), b1, b2]
        ],
        out_specs=pl.BlockSpec((tb, NCLASS_PAD), lambda i: (i, 0)),
        compiler_params=pltpu.CompilerParams(
            dimension_semantics=("parallel",)),
        cost_estimate=cost,
    )(xb, operands["w2big"], operands["sucat"], operands["rscat"],
      operands["off"], operands["mblk"], operands["wfcf"], operands["bfc"],
      operands["scal"])
    return out[:b, :NCLASS]


# ----------------------------------------------------------------------------
# Parameter init (matches the reference module's parameter set).
# ----------------------------------------------------------------------------
def init_params(key):
    ks = jax.random.split(key, 7)
    return {
        "w1": 0.5 * jax.random.normal(ks[0], (2, 2), jnp.float32),   # conv1 kernel
        "b1": 0.1 * jax.random.normal(ks[1], (), jnp.float32),
        "b2": 0.1 * jax.random.normal(ks[3], (), jnp.float32),
        "w2": 0.5 * jax.random.normal(ks[2], (2, 2), jnp.float32),   # conv2 kernel
        "qw": jax.random.normal(ks[4], (2, 2), jnp.float32),         # QuantumConv2d weight
        "wfc": 0.1 * jax.random.normal(ks[5], (64, NCLASS), jnp.float32),
        "bfc": 0.1 * jax.random.normal(ks[6], (NCLASS,), jnp.float32),
    }


if __name__ == "__main__":
    key = jax.random.PRNGKey(0)
    kx, kp = jax.random.split(key)
    x = jax.random.normal(kx, (2, 1, 28, 28), jnp.float32)       # NCHW, MNIST-sized
    params = init_params(kp)
    operands = build_operands(params)

    fwd = jax.jit(quantum_conv_net_forward)
    out = jax.block_until_ready(fwd(x, operands))

    assert out.shape == (2, NCLASS), out.shape
    row_sums = np.asarray(jnp.sum(out, axis=-1))
    assert np.allclose(row_sums, 1.0, atol=1e-4), row_sums
    assert np.all(np.asarray(out) >= 0.0)
    print("KERNEL_OK")
</pallas_src>

<mosaic_0001>
module attributes {stable_mosaic.version = 11 : i64} {
  func.func @_fused_forward_kernel(%arg0: i32, %arg1: memref<4x8x256xf32, #tpu.memory_space<vmem>>, %arg2: memref<256x64xf32, #tpu.memory_space<vmem>>, %arg3: memref<64x512xf32, #tpu.memory_space<vmem>>, %arg4: memref<64x512xf32, #tpu.memory_space<vmem>>, %arg5: memref<1x512xf32, #tpu.memory_space<vmem>>, %arg6: memref<512x512xbf16, #tpu.memory_space<vmem>>, %arg7: memref<256x128xf32, #tpu.memory_space<vmem>>, %arg8: memref<1x128xf32, #tpu.memory_space<vmem>>, %arg9: memref<6xf32, #tpu.memory_space<smem>>, %arg10: memref<8x128xf32, #tpu.memory_space<vmem>>) attributes {dimension_semantics = [#tpu.dimension_semantics<parallel>], iteration_bounds = array<i64: 1>, scalar_prefetch = 0 : i64, scratch_operands = 0 : i64, tpu.core_type = #tpu.core_type<tc>, window_params = [{transform_indices = @transform_0, window_bounds = array<i64: 4, 8, 256>}, {pipeline_mode = #tpu.pipeline_mode<synchronous>, transform_indices = @transform_1, window_bounds = array<i64: 256, 64>}, {pipeline_mode = #tpu.pipeline_mode<synchronous>, transform_indices = @transform_2, window_bounds = array<i64: 64, 512>}, {pipeline_mode = #tpu.pipeline_mode<synchronous>, transform_indices = @transform_3, window_bounds = array<i64: 64, 512>}, {pipeline_mode = #tpu.pipeline_mode<synchronous>, transform_indices = @transform_4, window_bounds = array<i64: 1, 512>}, {pipeline_mode = #tpu.pipeline_mode<synchronous>, transform_indices = @transform_5, window_bounds = array<i64: 512, 512>}, {pipeline_mode = #tpu.pipeline_mode<synchronous>, transform_indices = @transform_6, window_bounds = array<i64: 256, 128>}, {pipeline_mode = #tpu.pipeline_mode<synchronous>, transform_indices = @transform_7, window_bounds = array<i64: 1, 128>}, {transform_indices = @transform_8, window_bounds = array<i64: 6>}, {transform_indices = @transform_9, window_bounds = array<i64: 8, 128>}]} {
    %c0 = arith.constant 0 : index
    %0 = memref.load %arg9[%c0] : memref<6xf32, #tpu.memory_space<smem>>
    %c0_0 = arith.constant 0 : index
    %c0_1 = arith.constant 0 : index
    %c0_2 = arith.constant 0 : index
    %1 = vector.load %arg1[%c0_0, %c0_1, %c0_2] : memref<4x8x256xf32, #tpu.memory_space<vmem>>, vector<1x8x256xf32>
    %2 = vector.shape_cast %1 : vector<1x8x256xf32> to vector<8x256xf32>
    %3 = vector.broadcast %0 : f32 to vector<8x256xf32>
    %4 = arith.mulf %3, %2 : vector<8x256xf32>
    %c1 = arith.constant 1 : index
    %5 = memref.load %arg9[%c1] : memref<6xf32, #tpu.memory_space<smem>>
    %c1_3 = arith.constant 1 : index
    %c0_4 = arith.constant 0 : index
    %c0_5 = arith.constant 0 : index
    %6 = vector.load %arg1[%c1_3, %c0_4, %c0_5] : memref<4x8x256xf32, #tpu.memory_space<vmem>>, vector<1x8x256xf32>
    %7 = vector.shape_cast %6 : vector<1x8x256xf32> to vector<8x256xf32>
    %8 = vector.broadcast %5 : f32 to vector<8x256xf32>
    %9 = arith.mulf %8, %7 : vector<8x256xf32>
    %10 = arith.addf %4, %9 : vector<8x256xf32>
    %c2 = arith.constant 2 : index
    %11 = memref.load %arg9[%c2] : memref<6xf32, #tpu.memory_space<smem>>
    %c2_6 = arith.constant 2 : index
    %c0_7 = arith.constant 0 : index
    %c0_8 = arith.constant 0 : index
    %12 = vector.load %arg1[%c2_6, %c0_7, %c0_8] : memref<4x8x256xf32, #tpu.memory_space<vmem>>, vector<1x8x256xf32>
    %13 = vector.shape_cast %12 : vector<1x8x256xf32> to vector<8x256xf32>
    %14 = vector.broadcast %11 : f32 to vector<8x256xf32>
    %15 = arith.mulf %14, %13 : vector<8x256xf32>
    %16 = arith.addf %10, %15 : vector<8x256xf32>
    %c3 = arith.constant 3 : index
    %17 = memref.load %arg9[%c3] : memref<6xf32, #tpu.memory_space<smem>>
    %c3_9 = arith.constant 3 : index
    %c0_10 = arith.constant 0 : index
    %c0_11 = arith.constant 0 : index
    %18 = vector.load %arg1[%c3_9, %c0_10, %c0_11] : memref<4x8x256xf32, #tpu.memory_space<vmem>>, vector<1x8x256xf32>
    %19 = vector.shape_cast %18 : vector<1x8x256xf32> to vector<8x256xf32>
    %20 = vector.broadcast %17 : f32 to vector<8x256xf32>
    %21 = arith.mulf %20, %19 : vector<8x256xf32>
    %22 = arith.addf %16, %21 : vector<8x256xf32>
    %c4 = arith.constant 4 : index
    %23 = memref.load %arg9[%c4] : memref<6xf32, #tpu.memory_space<smem>>
    %24 = vector.broadcast %23 : f32 to vector<8x256xf32>
    %25 = arith.addf %22, %24 : vector<8x256xf32>
    %cst = arith.constant 0.000000e+00 : f32
    %26 = vector.broadcast %cst : f32 to vector<8x256xf32>
    %27 = arith.maximumf %25, %26 : vector<8x256xf32>
    %c0_12 = arith.constant 0 : index
    %c0_13 = arith.constant 0 : index
    %28 = vector.load %arg2[%c0_12, %c0_13] : memref<256x64xf32, #tpu.memory_space<vmem>>, vector<256x64xf32>
    %cst_14 = arith.constant dense<0.000000e+00> : vector<8x64xf32>
    %29 = tpu.matmul %27, %28, %cst_14 {dimension_numbers = #tpu.dot_dimension_numbers<[1], [0], [0], [1], [0, 0, 1, 1], [], []>} : vector<8x256xf32>, vector<256x64xf32>, vector<8x64xf32> -> vector<8x64xf32>
    %c5 = arith.constant 5 : index
    %30 = memref.load %arg9[%c5] : memref<6xf32, #tpu.memory_space<smem>>
    %31 = vector.broadcast %30 : f32 to vector<8x64xf32>
    %32 = arith.addf %29, %31 : vector<8x64xf32>
    %cst_15 = arith.constant 0.000000e+00 : f32
    %33 = vector.broadcast %cst_15 : f32 to vector<8x64xf32>
    %34 = arith.maximumf %32, %33 : vector<8x64xf32>
    %c0_16 = arith.constant 0 : index
    %c0_17 = arith.constant 0 : index
    %35 = vector.load %arg3[%c0_16, %c0_17] : memref<64x512xf32, #tpu.memory_space<vmem>>, vector<64x512xf32>
    %cst_18 = arith.constant dense<0.000000e+00> : vector<8x512xf32>
    %36 = tpu.matmul %34, %35, %cst_18 {dimension_numbers = #tpu.dot_dimension_numbers<[1], [0], [0], [1], [0, 0, 1, 1], [], []>} : vector<8x64xf32>, vector<64x512xf32>, vector<8x512xf32> -> vector<8x512xf32>
    %37 = arith.mulf %34, %34 : vector<8x64xf32>
    %c0_19 = arith.constant 0 : index
    %c0_20 = arith.constant 0 : index
    %38 = vector.load %arg4[%c0_19, %c0_20] : memref<64x512xf32, #tpu.memory_space<vmem>>, vector<64x512xf32>
    %cst_21 = arith.constant dense<0.000000e+00> : vector<8x512xf32>
    %39 = tpu.matmul %37, %38, %cst_21 {dimension_numbers = #tpu.dot_dimension_numbers<[1], [0], [0], [1], [0, 0, 1, 1], [], []>} : vector<8x64xf32>, vector<64x512xf32>, vector<8x512xf32> -> vector<8x512xf32>
    %cst_22 = arith.constant 5.000000e-01 : f32
    %40 = vector.broadcast %cst_22 : f32 to vector<8x512xf32>
    %41 = arith.mulf %40, %36 : vector<8x512xf32>
    %42 = arith.mulf %36, %36 : vector<8x512xf32>
    %cst_23 = arith.constant 2.500000e-01 : f32
    %43 = vector.broadcast %cst_23 : f32 to vector<8x512xf32>
    %44 = arith.mulf %43, %42 : vector<8x512xf32>
    %45 = arith.subf %41, %44 : vector<8x512xf32>
    %cst_24 = arith.constant 2.500000e-01 : f32
    %46 = vector.broadcast %cst_24 : f32 to vector<8x512xf32>
    %47 = arith.mulf %46, %39 : vector<8x512xf32>
    %48 = arith.addf %45, %47 : vector<8x512xf32>
    %c0_25 = arith.constant 0 : index
    %c0_26 = arith.constant 0 : index
    %49 = vector.load %arg5[%c0_25, %c0_26] : memref<1x512xf32, #tpu.memory_space<vmem>>, vector<1x512xf32>
    %50 = vector.broadcast %49 : vector<1x512xf32> to vector<8x512xf32>
    %51 = arith.addf %48, %50 : vector<8x512xf32>
    %52 = math.sin %51 : vector<8x512xf32>
    %cst_27 = arith.constant 2.500000e-01 : f32
    %53 = vector.broadcast %cst_27 : f32 to vector<8x512xf32>
    %54 = arith.mulf %53, %52 : vector<8x512xf32>
    %55 = arith.truncf %54 : vector<8x512xf32> to vector<8x512xbf16>
    %c0_28 = arith.constant 0 : index
    %c0_29 = arith.constant 0 : index
    %56 = vector.load %arg6[%c0_28, %c0_29] : memref<512x512xbf16, #tpu.memory_space<vmem>>, vector<512x512xbf16>
    %cst_30 = arith.constant dense<0.000000e+00> : vector<8x512xf32>
    %57 = tpu.matmul %55, %56, %cst_30 {dimension_numbers = #tpu.dot_dimension_numbers<[1], [0], [0], [1], [0, 0, 1, 1], [], []>} : vector<8x512xbf16>, vector<512x512xbf16>, vector<8x512xf32> -> vector<8x512xf32>
    %58 = vector.extract_strided_slice %57 {offsets = [0, 0], sizes = [8, 256], strides = [1, 1]} : vector<8x512xf32> to vector<8x256xf32>
    %59 = vector.extract_strided_slice %57 {offsets = [0, 256], sizes = [8, 256], strides = [1, 1]} : vector<8x512xf32> to vector<8x256xf32>
    %60 = arith.mulf %58, %58 : vector<8x256xf32>
    %61 = arith.mulf %59, %59 : vector<8x256xf32>
    %62 = arith.addf %60, %61 : vector<8x256xf32>
    %c0_31 = arith.constant 0 : index
    %c0_32 = arith.constant 0 : index
    %63 = vector.load %arg7[%c0_31, %c0_32] : memref<256x128xf32, #tpu.memory_space<vmem>>, vector<256x128xf32>
    %cst_33 = arith.constant dense<0.000000e+00> : vector<8x128xf32>
    %64 = tpu.matmul %62, %63, %cst_33 {dimension_numbers = #tpu.dot_dimension_numbers<[1], [0], [0], [1], [0, 0, 1, 1], [], []>} : vector<8x256xf32>, vector<256x128xf32>, vector<8x128xf32> -> vector<8x128xf32>
    %c0_34 = arith.constant 0 : index
    %c0_35 = arith.constant 0 : index
    %65 = vector.load %arg8[%c0_34, %c0_35] : memref<1x128xf32, #tpu.memory_space<vmem>>, vector<1x128xf32>
    %66 = vector.broadcast %65 : vector<1x128xf32> to vector<8x128xf32>
    %67 = arith.addf %64, %66 : vector<8x128xf32>
    %cst_36 = arith.constant dense<0xFF800000> : vector<8xf32>
    %68 = vector.multi_reduction <maximumf>, %67, %cst_36 [1] : vector<8x128xf32> to vector<8xf32>
    %69 = vector.shape_cast %68 : vector<8xf32> to vector<8x1xf32>
    %70 = vector.broadcast %69 : vector<8x1xf32> to vector<8x128xf32>
    %71 = arith.subf %67, %70 : vector<8x128xf32>
    %72 = math.exp %71 : vector<8x128xf32>
    %cst_37 = arith.constant dense<0.000000e+00> : vector<8xf32>
    %73 = vector.multi_reduction <add>, %72, %cst_37 [1] : vector<8x128xf32> to vector<8xf32>
    %74 = vector.shape_cast %73 : vector<8xf32> to vector<8x1xf32>
    %75 = vector.broadcast %74 : vector<8x1xf32> to vector<8x128xf32>
    %76 = arith.divf %72, %75 : vector<8x128xf32>
    %c0_38 = arith.constant 0 : index
    %c0_39 = arith.constant 0 : index
    %77 = vector.load %arg10[%c0_38, %c0_39] : memref<8x128xf32, #tpu.memory_space<vmem>>, vector<8x128xf32>
    tpu.vector_store %arg10[%c0_38, %c0_39], %76 {strides = array<i32>} : memref<8x128xf32, #tpu.memory_space<vmem>>, vector<8x128xf32>,
    return
  }
  func.func @transform_0(%arg0: i32) -> (i32, i32, i32) {
    %c0_i32 = arith.constant 0 : i32
    %c0_i32_0 = arith.constant 0 : i32
    %c0_i32_1 = arith.constant 0 : i32
    return %c0_i32, %arg0, %c0_i32_0 : i32, i32, i32
  }
  func.func @transform_1(%arg0: i32) -> (i32, i32) {
    %c0_i32 = arith.constant 0 : i32
    %c0_i32_0 = arith.constant 0 : i32
    %c0_i32_1 = arith.constant 0 : i32
    return %c0_i32, %c0_i32_0 : i32, i32
  }
  func.func @transform_2(%arg0: i32) -> (i32, i32) {
    %c0_i32 = arith.constant 0 : i32
    %c0_i32_0 = arith.constant 0 : i32
    %c0_i32_1 = arith.constant 0 : i32
    return %c0_i32, %c0_i32_0 : i32, i32
  }
  func.func @transform_3(%arg0: i32) -> (i32, i32) {
    %c0_i32 = arith.constant 0 : i32
    %c0_i32_0 = arith.constant 0 : i32
    %c0_i32_1 = arith.constant 0 : i32
    return %c0_i32, %c0_i32_0 : i32, i32
  }
  func.func @transform_4(%arg0: i32) -> (i32, i32) {
    %c0_i32 = arith.constant 0 : i32
    %c0_i32_0 = arith.constant 0 : i32
    %c0_i32_1 = arith.constant 0 : i32
    return %c0_i32, %c0_i32_0 : i32, i32
  }
  func.func @transform_5(%arg0: i32) -> (i32, i32) {
    %c0_i32 = arith.constant 0 : i32
    %c0_i32_0 = arith.constant 0 : i32
    %c0_i32_1 = arith.constant 0 : i32
    return %c0_i32, %c0_i32_0 : i32, i32
  }
  func.func @transform_6(%arg0: i32) -> (i32, i32) {
    %c0_i32 = arith.constant 0 : i32
    %c0_i32_0 = arith.constant 0 : i32
    %c0_i32_1 = arith.constant 0 : i32
    return %c0_i32, %c0_i32_0 : i32, i32
  }
  func.func @transform_7(%arg0: i32) -> (i32, i32) {
    %c0_i32 = arith.constant 0 : i32
    %c0_i32_0 = arith.constant 0 : i32
    %c0_i32_1 = arith.constant 0 : i32
    return %c0_i32, %c0_i32_0 : i32, i32
  }
  func.func @transform_8(%arg0: i32) -> i32 {
    %c0_i32 = arith.constant 0 : i32
    %c0_i32_0 = arith.constant 0 : i32
    return %c0_i32 : i32
  }
  func.func @transform_9(%arg0: i32) -> (i32, i32) {
    %c0_i32 = arith.constant 0 : i32
    %c0_i32_0 = arith.constant 0 : i32
    return %arg0, %c0_i32 : i32, i32
  }
}

</mosaic_0001>

<llo_original>
// kernel: quantum_conv_net_forward.1
$region0: #{quantum_conv_net_forward.1}
  #allocation0 [shape = 'u32[]', space=smem, size = 0x4, offset = 0x4, fixed_abs, tag = 'smem constant byte address 0x4 - core index']
  #allocation1 [shape = 'u32[144,128]{1,0:T(1,128)}', space=vmem, size = 0x12000, scoped, tag = 'internal scratch']
  %s0 = inlined_call_operand.vmem [shape: f32[4,8,256], index: 0, kind: input, shape index: {}]
  %s1 = inlined_call_operand.vmem [shape: f32[256,64], index: 1, kind: input, shape index: {}]
  %s2 = inlined_call_operand.vmem [shape: f32[64,512], index: 2, kind: input, shape index: {}]
  %s3 = inlined_call_operand.vmem [shape: f32[64,512], index: 3, kind: input, shape index: {}]
  %s4 = inlined_call_operand.vmem [shape: f32[1,512], index: 4, kind: input, shape index: {}]
  %s5 = inlined_call_operand.vmem [shape: bf16[512,512], index: 5, kind: input, shape index: {}]
  %s6 = inlined_call_operand.vmem [shape: f32[256,128], index: 6, kind: input, shape index: {}]
  %s7 = inlined_call_operand.vmem [shape: f32[1,128], index: 7, kind: input, shape index: {}]
  %s8 = inlined_call_operand.vmem [shape: f32[6], index: 8, kind: input, shape index: {}]
  %s9 = inlined_call_operand.vmem [shape: f32[8,128], index: 9, kind: output, shape index: {}]
  %s10 = sld [smem:[#allocation0]]
  $region50: #{quantum_conv_net_forward.1} parent=0
    _
  %s12 = ssub.s32 1, %s10
  %s13 = scalar_select 0, %s12, %s10
  $region1: #{quantum_conv_net_forward.1} parent=0
    #allocation2 [shape = 'u8[512]{0}', space=smem, size = 0x200, scoped, tag = 'input window, operand 8, single buffered']
    #allocation3 [shape = 's32[1]{0}', space=sflag, size = 0x4, scoped, tag = 'scoped memory for quantum_conv_net_forward.1']
    %14 = vsyncpa [#allocation3], 0
    // Predicated region
    $region2: #{quantum_conv_net_forward.1} parent=1 // pred_check
      _
    $region3: #{quantum_conv_net_forward.1} parent=1 // pred_check_branch
      %16 = sbr.rel (0) target = $region5
    $region4: #{quantum_conv_net_forward.1} parent=1 // pred_region
      _
    $region5: #{quantum_conv_net_forward.1} parent=1 // pred_fallthru
      _
    // Predicated region
    $region6: #{quantum_conv_net_forward.1} parent=1 // pred_check
      _
    $region7: #{quantum_conv_net_forward.1} parent=1 // pred_check_branch
      %18 = sbr.rel (0) target = $region9
    $region8: #{quantum_conv_net_forward.1} parent=1 // pred_region
      _
    $region9: #{quantum_conv_net_forward.1} parent=1 // pred_fallthru
      _
    // Predicated region
    $region10: #{quantum_conv_net_forward.1} parent=1 // pred_check
      _
    $region11: #{quantum_conv_net_forward.1} parent=1 // pred_check_branch
      %20 = sbr.rel (0) target = $region13
    $region12: #{quantum_conv_net_forward.1} parent=1 // pred_region
      _
    $region13: #{quantum_conv_net_forward.1} parent=1 // pred_fallthru
      _
    // Predicated region
    $region14: #{quantum_conv_net_forward.1} parent=1 // pred_check
      _
    $region15: #{quantum_conv_net_forward.1} parent=1 // pred_check_branch
      %22 = sbr.rel (0) target = $region17
    $region16: #{quantum_conv_net_forward.1} parent=1 // pred_region
      _
    $region17: #{quantum_conv_net_forward.1} parent=1 // pred_fallthru
      _
    // Predicated region
    $region18: #{quantum_conv_net_forward.1} parent=1 // pred_check
      _
    $region19: #{quantum_conv_net_forward.1} parent=1 // pred_check_branch
      %24 = sbr.rel (0) target = $region21
    $region20: #{quantum_conv_net_forward.1} parent=1 // pred_region
      _
    $region21: #{quantum_conv_net_forward.1} parent=1 // pred_fallthru
      _
    // Predicated region
    $region22: #{quantum_conv_net_forward.1} parent=1 // pred_check
      _
    $region23: #{quantum_conv_net_forward.1} parent=1 // pred_check_branch
      %26 = sbr.rel (0) target = $region25
    $region24: #{quantum_conv_net_forward.1} parent=1 // pred_region
      _
    $region25: #{quantum_conv_net_forward.1} parent=1 // pred_fallthru
      _
    // Predicated region
    $region26: #{quantum_conv_net_forward.1} parent=1 // pred_check
      _
    $region27: #{quantum_conv_net_forward.1} parent=1 // pred_check_branch
      %28 = sbr.rel (0) target = $region29
    $region28: #{quantum_conv_net_forward.1} parent=1 // pred_region
      _
    $region29: #{quantum_conv_net_forward.1} parent=1 // pred_fallthru
      _
    // Predicated region
    $region30: #{quantum_conv_net_forward.1} parent=1 // pred_check
      _
    $region31: #{quantum_conv_net_forward.1} parent=1 // pred_check_branch
      %30 = sbr.rel (0) target = $region33
    $region32: #{quantum_conv_net_forward.1} parent=1 // pred_region
      _
    $region33: #{quantum_conv_net_forward.1} parent=1 // pred_fallthru
      _
    // Predicated region
    $region34: #{quantum_conv_net_forward.1} parent=1 // pred_check
      _
    $region35: #{quantum_conv_net_forward.1} parent=1 // pred_check_branch
      %32 = sbr.rel (0) target = $region37
    $region36: #{quantum_conv_net_forward.1} parent=1 // pred_region
      %s34 = ssub.s32 16, 16
      %35 = vsyncadd [#allocation3], %s34
      %s37 = sshll.u32 %s8, 4
      %s38 = int_to_ptr.vmem [resolvable:$true] %s37
      %40 = dma.vmem_to_smem %s38, 16, [#allocation2], [#allocation3]
    $region37: #{quantum_conv_net_forward.1} parent=1 // pred_fallthru
      _
    // Predicated region
    $region38: #{quantum_conv_net_forward.1} parent=1 // pred_check
      _
    $region39: #{quantum_conv_net_forward.1} parent=1 // pred_check_branch
      %42 = sbr.rel (0) target = $region41
    $region40: #{quantum_conv_net_forward.1} parent=1 // pred_region
      %43 = dma.done [#allocation3], 16
    $region41: #{quantum_conv_net_forward.1} parent=1 // pred_fallthru
      _
    %44 = sfence
    %s45 = sld [smem:[#allocation2]]
    %v46 = vld [vmem:[%s0] sm:$0xff]
    %v47 = vld [vmem:[%s0 + $0x8] sm:$0xff]
    %v48 = vstv %s45
    %v49 = vmul.f32 %v48, %v46
    %v50 = vmul.f32 %v48, %v47
    %s51 = sld [smem:[#allocation2 + $0x1]]
    %s52 = scalar_lea.vmem %s0, 16
    %v53 = vld [vmem:[%s52] sm:$0xff]
    %v54 = vld [vmem:[%s52 + $0x8] sm:$0xff]
    %v55 = vstv %s51
    %v56 = vmul.f32 %v55, %v53
    %v57 = vmul.f32 %v55, %v54
    %v58 = vadd.f32 %v49, %v56
    %v59 = vadd.f32 %v50, %v57
    %s60 = sld [smem:[#allocation2 + $0x2]]
    %s61 = scalar_lea.vmem %s0, 32
    %v62 = vld [vmem:[%s61] sm:$0xff]
    %v63 = vld [vmem:[%s61 + $0x8] sm:$0xff]
    %v64 = vstv %s60
    %v65 = vmul.f32 %v64, %v62
    %v66 = vmul.f32 %v64, %v63
    %v67 = vadd.f32 %v58, %v65
    %v68 = vadd.f32 %v59, %v66
    %s69 = sld [smem:[#allocation2 + $0x3]]
    %s70 = scalar_lea.vmem %s0, 48
    %v71 = vld [vmem:[%s70] sm:$0xff]
    %v72 = vld [vmem:[%s70 + $0x8] sm:$0xff]
    %v73 = vstv %s69
    %v74 = vmul.f32 %v73, %v71
    %v75 = vmul.f32 %v73, %v72
    %v76 = vadd.f32 %v67, %v74
    %v77 = vadd.f32 %v68, %v75
    %s78 = sld [smem:[#allocation2 + $0x4]]
    %v79 = vstv %s78
    %v80 = vadd.f32 %v76, %v79
    %v81 = vadd.f32 %v77, %v79
    %v82 = vmax.f32 %v80, 0.0
    %v83 = vmax.f32 %v81, 0.0
    %v84 = vld [vmem:[%s1] sm:$0xff]
    %v85 = vld [vmem:[%s1 + $0x8] sm:$0xff]
    %v86 = vld [vmem:[%s1 + $0x10] sm:$0xff]
    %v87 = vld [vmem:[%s1 + $0x18] sm:$0xff]
    %v88 = vld [vmem:[%s1 + $0x20] sm:$0xff]
    %v89 = vld [vmem:[%s1 + $0x28] sm:$0xff]
    %v90 = vld [vmem:[%s1 + $0x30] sm:$0xff]
    %v91 = vld [vmem:[%s1 + $0x38] sm:$0xff]
    %v92 = vld [vmem:[%s1 + $0x40] sm:$0xff]
    %v93 = vld [vmem:[%s1 + $0x48] sm:$0xff]
    %v94 = vld [vmem:[%s1 + $0x50] sm:$0xff]
    %v95 = vld [vmem:[%s1 + $0x58] sm:$0xff]
    %v96 = vld [vmem:[%s1 + $0x60] sm:$0xff]
    %v97 = vld [vmem:[%s1 + $0x68] sm:$0xff]
    %v98 = vld [vmem:[%s1 + $0x70] sm:$0xff]
    %v99 = vld [vmem:[%s1 + $0x78] sm:$0xff]
    %v100 = vld [vmem:[%s1 + $0x80] sm:$0xff]
    %v101 = vld [vmem:[%s1 + $0x88] sm:$0xff]
    %v102 = vld [vmem:[%s1 + $0x90] sm:$0xff]
    %v103 = vld [vmem:[%s1 + $0x98] sm:$0xff]
    %v104 = vld [vmem:[%s1 + $0xa0] sm:$0xff]
    %v105 = vld [vmem:[%s1 + $0xa8] sm:$0xff]
    %v106 = vld [vmem:[%s1 + $0xb0] sm:$0xff]
    %v107 = vld [vmem:[%s1 + $0xb8] sm:$0xff]
    %v108 = vld [vmem:[%s1 + $0xc0] sm:$0xff]
    %v109 = vld [vmem:[%s1 + $0xc8] sm:$0xff]
    %v110 = vld [vmem:[%s1 + $0xd0] sm:$0xff]
    %v111 = vld [vmem:[%s1 + $0xd8] sm:$0xff]
    %v112 = vld [vmem:[%s1 + $0xe0] sm:$0xff]
    %v113 = vld [vmem:[%s1 + $0xe8] sm:$0xff]
    %v114 = vld [vmem:[%s1 + $0xf0] sm:$0xff]
    %v115 = vld [vmem:[%s1 + $0xf8] sm:$0xff]
    %s116 = sld [smem:[#allocation2 + $0x5]]
    %v117 = vstv %s116
    %118 = vmatprep.subr.mxu0 0.0
    %119 = vmatpush1.msra.mxu0 %v84
    %120 = vmatprep.subr.mxu0 0.0
    %121 = vmatpush1.msra.mxu0 %v85
    %122 = vmatprep.subr.mxu0 0.0
    %123 = vmatpush1.msra.mxu0 %v86
    %124 = vmatprep.subr.mxu0 0.0
    %125 = vmatpush1.msra.mxu0 %v87
    %126 = vmatprep.subr.mxu0 0.0
    %127 = vmatpush1.msra.mxu0 %v88
    %128 = vmatprep.subr.mxu0 0.0
    %129 = vmatpush1.msra.mxu0 %v89
    %130 = vmatprep.subr.mxu0 0.0
    %131 = vmatpush1.msra.mxu0 %v90
    %132 = vmatprep.subr.mxu0 0.0
    %133 = vmatpush1.msra.mxu0 %v91
    %134 = vmatprep.subr.mxu0 0.0
    %135 = vmatpush1.msra.mxu0 %v92
    %136 = vmatprep.subr.mxu0 0.0
    %137 = vmatpush1.msra.mxu0 %v93
    %138 = vmatprep.subr.mxu0 0.0
    %139 = vmatpush1.msra.mxu0 %v94
    %140 = vmatprep.subr.mxu0 0.0
    %141 = vmatpush1.msra.mxu0 %v95
    %142 = vmatprep.subr.mxu0 0.0
    %143 = vmatpush1.msra.mxu0 %v96
    %144 = vmatprep.subr.mxu0 0.0
    %145 = vmatpush1.msra.mxu0 %v97
    %146 = vmatprep.subr.mxu0 0.0
    %147 = vmatpush1.msra.mxu0 %v98
    %148 = vmatprep.subr.mxu0 0.0
    %149 = vmatpush1.msra.mxu0 %v99
    %150 = vmatprep.subr.mxu0 0.0
    %151 = vmatpush1.msra.mxu0 %v100
    %152 = vmatprep.subr.mxu0 0.0
    %153 = vmatpush1.msra.mxu0 %v101
    %154 = vmatprep.subr.mxu0 0.0
    %155 = vmatpush1.msra.mxu0 %v102
    %156 = vmatprep.subr.mxu0 0.0
    %157 = vmatpush1.msra.mxu0 %v103
    %158 = vmatprep.subr.mxu0 0.0
    %159 = vmatpush1.msra.mxu0 %v104
    %160 = vmatprep.subr.mxu0 0.0
    %161 = vmatpush1.msra.mxu0 %v105
    %162 = vmatprep.subr.mxu0 0.0
    %163 = vmatpush1.msra.mxu0 %v106
    %164 = vmatprep.subr.mxu0 0.0
    %165 = vmatpush1.msra.mxu0 %v107
    %166 = vmatprep.subr.mxu0 0.0
    %167 = vmatpush1.msra.mxu0 %v108
    %168 = vmatprep.subr.mxu0 0.0
    %169 = vmatpush1.msra.mxu0 %v109
    %170 = vmatprep.subr.mxu0 0.0
    %171 = vmatpush1.msra.mxu0 %v110
    %172 = vmatprep.subr.mxu0 0.0
    %173 = vmatpush1.msra.mxu0 %v111
    %174 = vmatprep.subr.mxu0 0.0
    %175 = vmatpush1.msra.mxu0 %v112
    %176 = vmatprep.subr.mxu0 0.0
    %177 = vmatpush1.msra.mxu0 %v113
    %178 = vmatprep.subr.mxu0 0.0
    %179 = vmatpush1.msra.mxu0 %v114
    %180 = vmatprep.subr.mxu0 0.0
    %181 = vmatpush1.msra.mxu0 %v115
    %182 = vmatprep.mubr.f32.mxu0 %v83
    %183 = vmatmul.mubr.f32.gmra.mrb[0].mxu0 %v82
    %v184 = vpop.f32.mrb[0].mxu0
    %v185 = vadd.f32 %v117, %v184
    %v186 = vpop.f32.mrb[0].mxu0
    %187 = vdwg.mxu0
    %v188 = vmax.f32 %v185, 0.0
    %v189 = vld [vmem:[%s2] sm:$0xff]
    %v190 = vld [vmem:[%s2 + $0x8] sm:$0xff]
    %v191 = vld [vmem:[%s2 + $0x10] sm:$0xff]
    %v192 = vld [vmem:[%s2 + $0x18] sm:$0xff]
    %v193 = vld [vmem:[%s2 + $0x20] sm:$0xff]
    %v194 = vld [vmem:[%s2 + $0x28] sm:$0xff]
    %v195 = vld [vmem:[%s2 + $0x30] sm:$0xff]
    %v196 = vld [vmem:[%s2 + $0x38] sm:$0xff]
    %v197 = vld [vmem:[%s2 + $0x40] sm:$0xff]
    %v198 = vld [vmem:[%s2 + $0x48] sm:$0xff]
    %v199 = vld [vmem:[%s2 + $0x50] sm:$0xff]
    %v200 = vld [vmem:[%s2 + $0x58] sm:$0xff]
    %v201 = vld [vmem:[%s2 + $0x60] sm:$0xff]
    %v202 = vld [vmem:[%s2 + $0x68] sm:$0xff]
    %v203 = vld [vmem:[%s2 + $0x70] sm:$0xff]
    %v204 = vld [vmem:[%s2 + $0x78] sm:$0xff]
    %v205 = vld [vmem:[%s2 + $0x80] sm:$0xff]
    %v206 = vld [vmem:[%s2 + $0x88] sm:$0xff]
    %v207 = vld [vmem:[%s2 + $0x90] sm:$0xff]
    %v208 = vld [vmem:[%s2 + $0x98] sm:$0xff]
    %v209 = vld [vmem:[%s2 + $0xa0] sm:$0xff]
    %v210 = vld [vmem:[%s2 + $0xa8] sm:$0xff]
    %v211 = vld [vmem:[%s2 + $0xb0] sm:$0xff]
    %v212 = vld [vmem:[%s2 + $0xb8] sm:$0xff]
    %v213 = vld [vmem:[%s2 + $0xc0] sm:$0xff]
    %v214 = vld [vmem:[%s2 + $0xc8] sm:$0xff]
    %v215 = vld [vmem:[%s2 + $0xd0] sm:$0xff]
    %v216 = vld [vmem:[%s2 + $0xd8] sm:$0xff]
    %v217 = vld [vmem:[%s2 + $0xe0] sm:$0xff]
    %v218 = vld [vmem:[%s2 + $0xe8] sm:$0xff]
    %v219 = vld [vmem:[%s2 + $0xf0] sm:$0xff]
    %v220 = vld [vmem:[%s2 + $0xf8] sm:$0xff]
    %vm221 = vcmask 523264
    %v223 = vsel %vm221, %v188, 0
    %225 = vmatprep.subr.mxu0 %v190
    %226 = vmatpush1.msra.mxu0 %v189
    %227 = vmatprep.subr.mxu0 %v194
    %228 = vmatpush1.msra.mxu0 %v193
    %229 = vmatprep.subr.mxu0 %v198
    %230 = vmatpush1.msra.mxu0 %v197
    %231 = vmatprep.subr.mxu0 %v202
    %232 = vmatpush1.msra.mxu0 %v201
    %233 = vmatprep.subr.mxu0 %v206
    %234 = vmatpush1.msra.mxu0 %v205
    %235 = vmatprep.subr.mxu0 %v210
    %236 = vmatpush1.msra.mxu0 %v209
    %237 = vmatprep.subr.mxu0 %v214
    %238 = vmatpush1.msra.mxu0 %v213
    %239 = vmatprep.subr.mxu0 %v218
    %240 = vmatpush1.msra.mxu0 %v217
    %241 = vmatprep.subr.mxu0 0.0
    %242 = vmatpush1.msra.mxu0 0.0
    %243 = vmatprep.subr.mxu0 0.0
    %244 = vmatpush1.msra.mxu0 0.0
    %245 = vmatprep.subr.mxu0 0.0
    %246 = vmatpush1.msra.mxu0 0.0
    %247 = vmatprep.subr.mxu0 0.0
    %248 = vmatpush1.msra.mxu0 0.0
    %249 = vmatprep.subr.mxu0 0.0
    %250 = vmatpush1.msra.mxu0 0.0
    %251 = vmatprep.subr.mxu0 0.0
    %252 = vmatpush1.msra.mxu0 0.0
    %253 = vmatprep.subr.mxu0 0.0
    %254 = vmatpush1.msra.mxu0 0.0
    %255 = vmatprep.subr.mxu0 0.0
    %256 = vmatpush1.msra.mxu0 0.0
    %257 = vmatprep.subr.mxu0 0.0
    %258 = vmatpush1.msra.mxu0 0.0
    %259 = vmatprep.subr.mxu0 0.0
    %260 = vmatpush1.msra.mxu0 0.0
    %261 = vmatprep.subr.mxu0 0.0
    %262 = vmatpush1.msra.mxu0 0.0
    %263 = vmatprep.subr.mxu0 0.0
    %264 = vmatpush1.msra.mxu0 0.0
    %265 = vmatprep.subr.mxu0 0.0
    %266 = vmatpush1.msra.mxu0 0.0
    %267 = vmatprep.subr.mxu0 0.0
    %268 = vmatpush1.msra.mxu0 0.0
    %269 = vmatprep.subr.mxu0 0.0
    %270 = vmatpush1.msra.mxu0 0.0
    %271 = vmatprep.subr.mxu0 0.0
    %272 = vmatpush1.msra.mxu0 0.0
    %273 = vmatprep.subr.mxu0 0.0
    %274 = vmatpush1.msra.mxu0 0.0
    %275 = vmatprep.subr.mxu0 0.0
    %276 = vmatpush1.msra.mxu0 0.0
    %277 = vmatprep.subr.mxu0 0.0
    %278 = vmatpush1.msra.mxu0 0.0
    %279 = vmatprep.subr.mxu0 0.0
    %280 = vmatpush1.msra.mxu0 0.0
    %281 = vmatprep.subr.mxu0 0.0
    %282 = vmatpush1.msra.mxu0 0.0
    %283 = vmatprep.subr.mxu0 0.0
    %284 = vmatpush1.msra.mxu0 0.0
    %285 = vmatprep.subr.mxu0 0.0
    %286 = vmatpush1.msra.mxu0 0.0
    %287 = vmatprep.subr.mxu0 0.0
    %288 = vmatpush1.msra.mxu0 0.0
    %289 = vmatprep.mubr.f32.mxu0 0.0
    %290 = vmatmul.mubr.f32.gmra.mrb[0].mxu0 %v223
    %v291 = vpop.f32.mrb[0].mxu0
    %v292 = vadd.f32 0.0, %v291
    %v293 = vpop.f32.mrb[0].mxu0
    %v294 = vadd.f32 0.0, %v293
    %295 = vdwg.mxu0
    %296 = vmatprep.subr.mxu0 %v192
    %297 = vmatpush1.msra.mxu0 %v191
    %298 = vmatprep.subr.mxu0 %v196
    %299 = vmatpush1.msra.mxu0 %v195
    %300 = vmatprep.subr.mxu0 %v200
    %301 = vmatpush1.msra.mxu0 %v199
    %302 = vmatprep.subr.mxu0 %v204
    %303 = vmatpush1.msra.mxu0 %v203
    %304 = vmatprep.subr.mxu0 %v208
    %305 = vmatpush1.msra.mxu0 %v207
    %306 = vmatprep.subr.mxu0 %v212
    %307 = vmatpush1.msra.mxu0 %v211
    %308 = vmatprep.subr.mxu0 %v216
    %309 = vmatpush1.msra.mxu0 %v215
    %310 = vmatprep.subr.mxu0 %v220
    %311 = vmatpush1.msra.mxu0 %v219
    %312 = vmatprep.subr.mxu0 0.0
    %313 = vmatpush1.msra.mxu0 0.0
    %314 = vmatprep.subr.mxu0 0.0
    %315 = vmatpush1.msra.mxu0 0.0
    %316 = vmatprep.subr.mxu0 0.0
    %317 = vmatpush1.msra.mxu0 0.0
    %318 = vmatprep.subr.mxu0 0.0
    %319 = vmatpush1.msra.mxu0 0.0
    %320 = vmatprep.subr.mxu0 0.0
    %321 = vmatpush1.msra.mxu0 0.0
    %322 = vmatprep.subr.mxu0 0.0
    %323 = vmatpush1.msra.mxu0 0.0
    %324 = vmatprep.subr.mxu0 0.0
    %325 = vmatpush1.msra.mxu0 0.0
    %326 = vmatprep.subr.mxu0 0.0
    %327 = vmatpush1.msra.mxu0 0.0
    %328 = vmatprep.subr.mxu0 0.0
    %329 = vmatpush1.msra.mxu0 0.0
    %330 = vmatprep.subr.mxu0 0.0
    %331 = vmatpush1.msra.mxu0 0.0
    %332 = vmatprep.subr.mxu0 0.0
    %333 = vmatpush1.msra.mxu0 0.0
    %334 = vmatprep.subr.mxu0 0.0
    %335 = vmatpush1.msra.mxu0 0.0
    %336 = vmatprep.subr.mxu0 0.0
    %337 = vmatpush1.msra.mxu0 0.0
    %338 = vmatprep.subr.mxu0 0.0
    %339 = vmatpush1.msra.mxu0 0.0
    %340 = vmatprep.subr.mxu0 0.0
    %341 = vmatpush1.msra.mxu0 0.0
    %342 = vmatprep.subr.mxu0 0.0
    %343 = vmatpush1.msra.mxu0 0.0
    %344 = vmatprep.subr.mxu0 0.0
    %345 = vmatpush1.msra.mxu0 0.0
    %346 = vmatprep.subr.mxu0 0.0
    %347 = vmatpush1.msra.mxu0 0.0
    %348 = vmatprep.subr.mxu0 0.0
    %349 = vmatpush1.msra.mxu0 0.0
    %350 = vmatprep.subr.mxu0 0.0
    %351 = vmatpush1.msra.mxu0 0.0
    %352 = vmatprep.subr.mxu0 0.0
    %353 = vmatpush1.msra.mxu0 0.0
    %354 = vmatprep.subr.mxu0 0.0
    %355 = vmatpush1.msra.mxu0 0.0
    %356 = vmatprep.subr.mxu0 0.0
    %357 = vmatpush1.msra.mxu0 0.0
    %358 = vmatprep.subr.mxu0 0.0
    %359 = vmatpush1.msra.mxu0 0.0
    %360 = vmatprep.mubr.f32.mxu0 0.0
    %361 = vmatmul.mubr.f32.gmra.mrb[0].mxu0 %v223
    %v362 = vpop.f32.mrb[0].mxu0
    %v363 = vadd.f32 0.0, %v362
    %v364 = vpop.f32.mrb[0].mxu0
    %v365 = vadd.f32 0.0, %v364
    %366 = vdwg.mxu0
    %v367 = vmul.f32 %v188, %v188
    %v368 = vld [vmem:[%s3] sm:$0xff]
    %v369 = vld [vmem:[%s3 + $0x8] sm:$0xff]
    %v370 = vld [vmem:[%s3 + $0x10] sm:$0xff]
    %v371 = vld [vmem:[%s3 + $0x18] sm:$0xff]
    %v372 = vld [vmem:[%s3 + $0x20] sm:$0xff]
    %v373 = vld [vmem:[%s3 + $0x28] sm:$0xff]
    %v374 = vld [vmem:[%s3 + $0x30] sm:$0xff]
    %v375 = vld [vmem:[%s3 + $0x38] sm:$0xff]
    %v376 = vld [vmem:[%s3 + $0x40] sm:$0xff]
    %v377 = vld [vmem:[%s3 + $0x48] sm:$0xff]
    %v378 = vld [vmem:[%s3 + $0x50] sm:$0xff]
    %v379 = vld [vmem:[%s3 + $0x58] sm:$0xff]
    %v380 = vld [vmem:[%s3 + $0x60] sm:$0xff]
    %v381 = vld [vmem:[%s3 + $0x68] sm:$0xff]
    %v382 = vld [vmem:[%s3 + $0x70] sm:$0xff]
    %v383 = vld [vmem:[%s3 + $0x78] sm:$0xff]
    %v384 = vld [vmem:[%s3 + $0x80] sm:$0xff]
    %v385 = vld [vmem:[%s3 + $0x88] sm:$0xff]
    %v386 = vld [vmem:[%s3 + $0x90] sm:$0xff]
    %v387 = vld [vmem:[%s3 + $0x98] sm:$0xff]
    %v388 = vld [vmem:[%s3 + $0xa0] sm:$0xff]
    %v389 = vld [vmem:[%s3 + $0xa8] sm:$0xff]
    %v390 = vld [vmem:[%s3 + $0xb0] sm:$0xff]
    %v391 = vld [vmem:[%s3 + $0xb8] sm:$0xff]
    %v392 = vld [vmem:[%s3 + $0xc0] sm:$0xff]
    %v393 = vld [vmem:[%s3 + $0xc8] sm:$0xff]
    %v394 = vld [vmem:[%s3 + $0xd0] sm:$0xff]
    %v395 = vld [vmem:[%s3 + $0xd8] sm:$0xff]
    %v396 = vld [vmem:[%s3 + $0xe0] sm:$0xff]
    %v397 = vld [vmem:[%s3 + $0xe8] sm:$0xff]
    %v398 = vld [vmem:[%s3 + $0xf0] sm:$0xff]
    %v399 = vld [vmem:[%s3 + $0xf8] sm:$0xff]
    %v401 = vsel %vm221, %v367, 0
    %403 = vmatprep.subr.mxu0 %v369
    %404 = vmatpush1.msra.mxu0 %v368
    %405 = vmatprep.subr.mxu0 %v373
    %406 = vmatpush1.msra.mxu0 %v372
    %407 = vmatprep.subr.mxu0 %v377
    %408 = vmatpush1.msra.mxu0 %v376
    %409 = vmatprep.subr.mxu0 %v381
    %410 = vmatpush1.msra.mxu0 %v380
    %411 = vmatprep.subr.mxu0 %v385
    %412 = vmatpush1.msra.mxu0 %v384
    %413 = vmatprep.subr.mxu0 %v389
    %414 = vmatpush1.msra.mxu0 %v388
    %415 = vmatprep.subr.mxu0 %v393
    %416 = vmatpush1.msra.mxu0 %v392
    %417 = vmatprep.subr.mxu0 %v397
    %418 = vmatpush1.msra.mxu0 %v396
    %419 = vmatprep.subr.mxu0 0.0
    %420 = vmatpush1.msra.mxu0 0.0
    %421 = vmatprep.subr.mxu0 0.0
    %422 = vmatpush1.msra.mxu0 0.0
    %423 = vmatprep.subr.mxu0 0.0
    %424 = vmatpush1.msra.mxu0 0.0
    %425 = vmatprep.subr.mxu0 0.0
    %426 = vmatpush1.msra.mxu0 0.0
    %427 = vmatprep.subr.mxu0 0.0
    %428 = vmatpush1.msra.mxu0 0.0
    %429 = vmatprep.subr.mxu0 0.0
    %430 = vmatpush1.msra.mxu0 0.0
    %431 = vmatprep.subr.mxu0 0.0
    %432 = vmatpush1.msra.mxu0 0.0
    %433 = vmatprep.subr.mxu0 0.0
    %434 = vmatpush1.msra.mxu0 0.0
    %435 = vmatprep.subr.mxu0 0.0
    %436 = vmatpush1.msra.mxu0 0.0
    %437 = vmatprep.subr.mxu0 0.0
    %438 = vmatpush1.msra.mxu0 0.0
    %439 = vmatprep.subr.mxu0 0.0
    %440 = vmatpush1.msra.mxu0 0.0
    %441 = vmatprep.subr.mxu0 0.0
    %442 = vmatpush1.msra.mxu0 0.0
    %443 = vmatprep.subr.mxu0 0.0
    %444 = vmatpush1.msra.mxu0 0.0
    %445 = vmatprep.subr.mxu0 0.0
    %446 = vmatpush1.msra.mxu0 0.0
    %447 = vmatprep.subr.mxu0 0.0
    %448 = vmatpush1.msra.mxu0 0.0
    %449 = vmatprep.subr.mxu0 0.0
    %450 = vmatpush1.msra.mxu0 0.0
    %451 = vmatprep.subr.mxu0 0.0
    %452 = vmatpush1.msra.mxu0 0.0
    %453 = vmatprep.subr.mxu0 0.0
    %454 = vmatpush1.msra.mxu0 0.0
    %455 = vmatprep.subr.mxu0 0.0
    %456 = vmatpush1.msra.mxu0 0.0
    %457 = vmatprep.subr.mxu0 0.0
    %458 = vmatpush1.msra.mxu0 0.0
    %459 = vmatprep.subr.mxu0 0.0
    %460 = vmatpush1.msra.mxu0 0.0
    %461 = vmatprep.subr.mxu0 0.0
    %462 = vmatpush1.msra.mxu0 0.0
    %463 = vmatprep.subr.mxu0 0.0
    %464 = vmatpush1.msra.mxu0 0.0
    %465 = vmatprep.subr.mxu0 0.0
    %466 = vmatpush1.msra.mxu0 0.0
    %467 = vmatprep.mubr.f32.mxu0 0.0
    %468 = vmatmul.mubr.f32.gmra.mrb[0].mxu0 %v401
    %v469 = vpop.f32.mrb[0].mxu0
    %v470 = vadd.f32 0.0, %v469
    %v471 = vpop.f32.mrb[0].mxu0
    %v472 = vadd.f32 0.0, %v471
    %473 = vdwg.mxu0
    %474 = vmatprep.subr.mxu0 %v371
    %475 = vmatpush1.msra.mxu0 %v370
    %476 = vmatprep.subr.mxu0 %v375
    %477 = vmatpush1.msra.mxu0 %v374
    %478 = vmatprep.subr.mxu0 %v379
    %479 = vmatpush1.msra.mxu0 %v378
    %480 = vmatprep.subr.mxu0 %v383
    %481 = vmatpush1.msra.mxu0 %v382
    %482 = vmatprep.subr.mxu0 %v387
    %483 = vmatpush1.msra.mxu0 %v386
    %484 = vmatprep.subr.mxu0 %v391
    %485 = vmatpush1.msra.mxu0 %v390
    %486 = vmatprep.subr.mxu0 %v395
    %487 = vmatpush1.msra.mxu0 %v394
    %488 = vmatprep.subr.mxu0 %v399
    %489 = vmatpush1.msra.mxu0 %v398
    %490 = vmatprep.subr.mxu0 0.0
    %491 = vmatpush1.msra.mxu0 0.0
    %492 = vmatprep.subr.mxu0 0.0
    %493 = vmatpush1.msra.mxu0 0.0
    %494 = vmatprep.subr.mxu0 0.0
    %495 = vmatpush1.msra.mxu0 0.0
    %496 = vmatprep.subr.mxu0 0.0
    %497 = vmatpush1.msra.mxu0 0.0
    %498 = vmatprep.subr.mxu0 0.0
    %499 = vmatpush1.msra.mxu0 0.0
    %500 = vmatprep.subr.mxu0 0.0
    %501 = vmatpush1.msra.mxu0 0.0
    %502 = vmatprep.subr.mxu0 0.0
    %503 = vmatpush1.msra.mxu0 0.0
    %504 = vmatprep.subr.mxu0 0.0
    %505 = vmatpush1.msra.mxu0 0.0
    %506 = vmatprep.subr.mxu0 0.0
    %507 = vmatpush1.msra.mxu0 0.0
    %508 = vmatprep.subr.mxu0 0.0
    %509 = vmatpush1.msra.mxu0 0.0
    %510 = vmatprep.subr.mxu0 0.0
    %511 = vmatpush1.msra.mxu0 0.0
    %512 = vmatprep.subr.mxu0 0.0
    %513 = vmatpush1.msra.mxu0 0.0
    %514 = vmatprep.subr.mxu0 0.0
    %515 = vmatpush1.msra.mxu0 0.0
    %516 = vmatprep.subr.mxu0 0.0
    %517 = vmatpush1.msra.mxu0 0.0
    %518 = vmatprep.subr.mxu0 0.0
    %519 = vmatpush1.msra.mxu0 0.0
    %520 = vmatprep.subr.mxu0 0.0
    %521 = vmatpush1.msra.mxu0 0.0
    %522 = vmatprep.subr.mxu0 0.0
    %523 = vmatpush1.msra.mxu0 0.0
    %524 = vmatprep.subr.mxu0 0.0
    %525 = vmatpush1.msra.mxu0 0.0
    %526 = vmatprep.subr.mxu0 0.0
    %527 = vmatpush1.msra.mxu0 0.0
    %528 = vmatprep.subr.mxu0 0.0
    %529 = vmatpush1.msra.mxu0 0.0
    %530 = vmatprep.subr.mxu0 0.0
    %531 = vmatpush1.msra.mxu0 0.0
    %532 = vmatprep.subr.mxu0 0.0
    %533 = vmatpush1.msra.mxu0 0.0
    %534 = vmatprep.subr.mxu0 0.0
    %535 = vmatpush1.msra.mxu0 0.0
    %536 = vmatprep.subr.mxu0 0.0
    %537 = vmatpush1.msra.mxu0 0.0
    %538 = vmatprep.mubr.f32.mxu0 0.0
    %539 = vmatmul.mubr.f32.gmra.mrb[0].mxu0 %v401
    %v540 = vpop.f32.mrb[0].mxu0
    %v541 = vadd.f32 0.0, %v540
    %v542 = vpop.f32.mrb[0].mxu0
    %v543 = vadd.f32 0.0, %v542
    %544 = vdwg.mxu0
    %v545 = vmul.f32 %v292, 0.5
    %v546 = vmul.f32 %v294, 0.5
    %v547 = vmul.f32 %v363, 0.5
    %v548 = vmul.f32 %v365, 0.5
    %v549 = vmul.f32 %v292, %v292
    %v550 = vmul.f32 %v294, %v294
    %v551 = vmul.f32 %v363, %v363
    %v552 = vmul.f32 %v365, %v365
    %v553 = vmul.f32 %v549, 0.25
    %v554 = vmul.f32 %v550, 0.25
    %v555 = vmul.f32 %v551, 0.25
    %v556 = vmul.f32 %v552, 0.25
    %v557 = vsub.f32 %v545, %v553
    %v558 = vsub.f32 %v546, %v554
    %v559 = vsub.f32 %v547, %v555
    %v560 = vsub.f32 %v548, %v556
    %v561 = vmul.f32 %v470, 0.25
    %v562 = vmul.f32 %v472, 0.25
    %v563 = vmul.f32 %v541, 0.25
    %v564 = vmul.f32 %v543, 0.25
    %v565 = vadd.f32 %v557, %v561
    %v566 = vadd.f32 %v558, %v562
    %v567 = vadd.f32 %v559, %v563
    %v568 = vadd.f32 %v560, %v564
    %v569 = vld [vmem:[%s4] sm:$0xf]
    %v571 = vlaneseq
    %v572 = vshrl.u32 %v571, 7
    %v573 = vsub.s32 0, %v572
    %v574 = vrot.slane %v569, %v573
    %v575 = vlaneseq
    %v576 = vshrl.u32 %v575, 7
    %v577 = vsub.s32 1, %v576
    %v578 = vrot.slane %v569, %v577
    %v579 = vlaneseq
    %v580 = vshrl.u32 %v579, 7
    %v581 = vsub.s32 2, %v580
    %v582 = vrot.slane %v569, %v581
    %v583 = vlaneseq
    %v584 = vshrl.u32 %v583, 7
    %v585 = vsub.s32 3, %v584
    %v586 = vrot.slane %v569, %v585
    %v591 = vadd.f32 %v565, %v574
    %v592 = vadd.f32 %v566, %v578
    %v593 = vadd.f32 %v567, %v582
    %v594 = vadd.f32 %v568, %v586
    %v595 = vand.u32 2147483647, %v591
    %vm596 = vcmp.le.f32.partialorder %v595, 0.7853982
    %vm597 = vcmp.lt.s32.totalorder %v591, 0
    %v598 = vand.u32 %v591, 2139095040
    %v599 = vshrl.u32 %v598, 23
    %v600 = vsub.s32 %v599, 127
    %v601 = vand.u32 2147483647, %v591
    %v602 = vand.u32 %v601, 8388607
    %v603 = vor.u32 %v602, 8388608
    %v604 = vsub.s32 0, %v603
    %v605 = vadd.s32 %v600, 1
    %vm606 = vcmp.gt.s32.totalorder %v605, 0
    %v607 = vsel %vm606, %v605, 0
    %v608 = vshrl.u32 %v607, 5
    %v609 = vand.u32 %v607, 31
    %v610 = vsub.s32 32, %v609
    %v611 = vshrl.u32 683565275, %v610
    %v612 = vshll.u32 683565275, %v609
    %v613 = vshrl.u32 2475754826, %v610
    %v614 = vor.u32 %v612, %v613
    %v615 = vshll.u32 2475754826, %v609
    %v616 = vshrl.u32 2131351028, %v610
    %v617 = vor.u32 %v615, %v616
    %v618 = vshll.u32 2131351028, %v609
    %v619 = vshrl.u32 2102212464, %v610
    %v620 = vor.u32 %v618, %v619
    %v621 = vshll.u32 2102212464, %v609
    %v622 = vshrl.u32 920167782, %v610
    %v623 = vor.u32 %v621, %v622
    %v624 = vshll.u32 920167782, %v609
    %v625 = vshrl.u32 1326507024, %v610
    %v626 = vor.u32 %v624, %v625
    %vm627 = vcmp.lt.s32.totalorder %v608, 1
    %vm628 = vcmp.lt.s32.totalorder %v608, 2
    %vm629 = vcmp.lt.s32.totalorder %v608, 3
    %vm630 = vcmp.lt.s32.totalorder %v608, 4
    %v631 = vsel %vm627, %v611, %v614
    %v632 = vsel %vm630, %v620, 2102212464
    %v633 = vsel %vm629, %v617, %v632
    %v634 = vsel %vm628, %v631, %v633
    %v635 = vsel %vm627, %v614, %v617
    %v636 = vsel %vm630, %v623, 920167782
    %v637 = vsel %vm629, %v620, %v636
    %v638 = vsel %vm628, %v635, %v637
    %v639 = vsel %vm627, %v617, %v620
    %v640 = vsel %vm630, %v626, 1326507024
    %v641 = vsel %vm629, %v623, %v640
    %v642 = vsel %vm628, %v639, %v641
    %v643 = vshll.u32 %v603, 8
    %v644 = vmul.u32.u64.compose %v643, %v642
    %v645 = vextract.low.u32 %v644
    %v646 = vextract.high.u32 %v644
    %v647 = vmul.u32.u64.compose %v643, %v638
    %v648 = vextract.low.u32 %v647
    %v649 = vextract.high.u32 %v647
    %v650 = vmul.u32 %v643, %v634
    %v651 = vadd.s32 %v646, %v648
    %vm652 = vc.u32 %v646, %v648
    %v653 = vadd.s32 %v649, 1
    %v654 = vsel %vm652, %v653, %v649
    %v655 = vadd.s32 %v650, %v654
    %v656 = vadd.s32 %v655, 536870912
    %v657 = vshrl.u32 %v656, 30
    %v658 = vshll.u32 %v657, 30
    %v659 = vsub.s32 %v655, %v658
    %vm660 = vcmp.lt.s32.totalorder %v659, 0
    %v661 = vsub.s32 0, %v659
    %v662 = vsel %vm660, %v661, %v659
    %v663 = vclz %v662
    %v664 = vsub.s32 %v663, 2
    %vm665 = vcmp.gt.s32.totalorder 0, %v664
    %v666 = vsel %vm665, 0, %v664
    %v667 = vsub.s32 32, %v666
    %v668 = vshll.u32 %v659, %v666
    %v669 = vshrl.u32 %v651, %v667
    %v670 = vor.u32 %v668, %v669
    %v671 = vsub.s32 4294967266, %v666
    %v672 = vadd.s32 %v671, 127
    %v673 = vshll.u32 %v672, 23
    %v674 = vor.u32 4788187, %v673
    %v675 = vand.u32 2147483647, %v674
    %v677 = vcvt.s32.f32 %v670
    %v678 = vmul.f32 %v677, %v675
    %v679 = vxor.u32 %v678, 2147483648
    %v680 = vsel %vm597, %v679, %v678
    %v681 = vsub.s32 4, %v657
    %v682 = vsel %vm597, %v681, %v657
    %v683 = vsel %vm596, %v591, %v680
    %v684 = vsel %vm596, 0, %v682
    %v685 = vcosq.f32.pop %v683
    %v686 = vsinq.f32.pop %v683
    %vm687 = vweird.f32 %v591
    %v688 = vadd.s32 %v684, 3
    %v689 = vand.u32 %v688, 3
    %vm690 = vcmp.lt.s32.totalorder %v689, 2
    %vm691 = vcmp.eq.s32.totalorder %v689, 0
    %v692 = vxor.u32 %v686, 2147483648
    %v693 = vsel %vm691, %v685, %v692
    %vm694 = vcmp.eq.s32.totalorder %v689, 2
    %v695 = vxor.u32 %v685, 2147483648
    %v696 = vsel %vm694, %v695, %v686
    %v697 = vsel %vm690, %v693, %v696
    %v698 = vsel %vm687, nan, %v697
    %v699 = vand.u32 2147483647, %v592
    %vm700 = vcmp.le.f32.partialorder %v699, 0.7853982
    %vm701 = vcmp.lt.s32.totalorder %v592, 0
    %v702 = vand.u32 %v592, 2139095040
    %v703 = vshrl.u32 %v702, 23
    %v704 = vsub.s32 %v703, 127
    %v705 = vand.u32 2147483647, %v592
    %v706 = vand.u32 %v705, 8388607
    %v707 = vor.u32 %v706, 8388608
    %v708 = vsub.s32 0, %v707
    %v709 = vadd.s32 %v704, 1
    %vm710 = vcmp.gt.s32.totalorder %v709, 0
    %v711 = vsel %vm710, %v709, 0
    %v712 = vshrl.u32 %v711, 5
    %v713 = vand.u32 %v711, 31
    %v714 = vsub.s32 32, %v713
    %v715 = vshrl.u32 683565275, %v714
    %v716 = vshll.u32 683565275, %v713
    %v717 = vshrl.u32 2475754826, %v714
    %v718 = vor.u32 %v716, %v717
    %v719 = vshll.u32 2475754826, %v713
    %v720 = vshrl.u32 2131351028, %v714
    %v721 = vor.u32 %v719, %v720
    %v722 = vshll.u32 2131351028, %v713
    %v723 = vshrl.u32 2102212464, %v714
    %v724 = vor.u32 %v722, %v723
    %v725 = vshll.u32 2102212464, %v713
    %v726 = vshrl.u32 920167782, %v714
    %v727 = vor.u32 %v725, %v726
    %v728 = vshll.u32 920167782, %v713
    %v729 = vshrl.u32 1326507024, %v714
    %v730 = vor.u32 %v728, %v729
    %vm731 = vcmp.lt.s32.totalorder %v712, 1
    %vm732 = vcmp.lt.s32.totalorder %v712, 2
    %vm733 = vcmp.lt.s32.totalorder %v712, 3
    %vm734 = vcmp.lt.s32.totalorder %v712, 4
    %v735 = vsel %vm731, %v715, %v718
    %v736 = vsel %vm734, %v724, 2102212464
    %v737 = vsel %vm733, %v721, %v736
    %v738 = vsel %vm732, %v735, %v737
    %v739 = vsel %vm731, %v718, %v721
    %v740 = vsel %vm734, %v727, 920167782
    %v741 = vsel %vm733, %v724, %v740
    %v742 = vsel %vm732, %v739, %v741
    %v743 = vsel %vm731, %v721, %v724
    %v744 = vsel %vm734, %v730, 1326507024
    %v745 = vsel %vm733, %v727, %v744
    %v746 = vsel %vm732, %v743, %v745
    %v747 = vshll.u32 %v707, 8
    %v748 = vmul.u32.u64.compose %v747, %v746
    %v749 = vextract.low.u32 %v748
    %v750 = vextract.high.u32 %v748
    %v751 = vmul.u32.u64.compose %v747, %v742
    %v752 = vextract.low.u32 %v751
    %v753 = vextract.high.u32 %v751
    %v754 = vmul.u32 %v747, %v738
    %v755 = vadd.s32 %v750, %v752
    %vm756 = vc.u32 %v750, %v752
    %v757 = vadd.s32 %v753, 1
    %v758 = vsel %vm756, %v757, %v753
    %v759 = vadd.s32 %v754, %v758
    %v760 = vadd.s32 %v759, 536870912
    %v761 = vshrl.u32 %v760, 30
    %v762 = vshll.u32 %v761, 30
    %v763 = vsub.s32 %v759, %v762
    %vm764 = vcmp.lt.s32.totalorder %v763, 0
    %v765 = vsub.s32 0, %v763
    %v766 = vsel %vm764, %v765, %v763
    %v767 = vclz %v766
    %v768 = vsub.s32 %v767, 2
    %vm769 = vcmp.gt.s32.totalorder 0, %v768
    %v770 = vsel %vm769, 0, %v768
    %v771 = vsub.s32 32, %v770
    %v772 = vshll.u32 %v763, %v770
    %v773 = vshrl.u32 %v755, %v771
    %v774 = vor.u32 %v772, %v773
    %v775 = vsub.s32 4294967266, %v770
    %v776 = vadd.s32 %v775, 127
    %v777 = vshll.u32 %v776, 23
    %v778 = vor.u32 4788187, %v777
    %v779 = vand.u32 2147483647, %v778
    %v781 = vcvt.s32.f32 %v774
    %v782 = vmul.f32 %v781, %v779
    %v783 = vxor.u32 %v782, 2147483648
    %v784 = vsel %vm701, %v783, %v782
    %v785 = vsub.s32 4, %v761
    %v786 = vsel %vm701, %v785, %v761
    %v787 = vsel %vm700, %v592, %v784
    %v788 = vsel %vm700, 0, %v786
    %v789 = vcosq.f32.pop %v787
    %v790 = vsinq.f32.pop %v787
    %vm791 = vweird.f32 %v592
    %v792 = vadd.s32 %v788, 3
    %v793 = vand.u32 %v792, 3
    %vm794 = vcmp.lt.s32.totalorder %v793, 2
    %vm795 = vcmp.eq.s32.totalorder %v793, 0
    %v796 = vxor.u32 %v790, 2147483648
    %v797 = vsel %vm795, %v789, %v796
    %vm798 = vcmp.eq.s32.totalorder %v793, 2
    %v799 = vxor.u32 %v789, 2147483648
    %v800 = vsel %vm798, %v799, %v790
    %v801 = vsel %vm794, %v797, %v800
    %v802 = vsel %vm791, nan, %v801
    %v803 = vand.u32 2147483647, %v593
    %vm804 = vcmp.le.f32.partialorder %v803, 0.7853982
    %vm805 = vcmp.lt.s32.totalorder %v593, 0
    %v806 = vand.u32 %v593, 2139095040
    %v807 = vshrl.u32 %v806, 23
    %v808 = vsub.s32 %v807, 127
    %v809 = vand.u32 2147483647, %v593
    %v810 = vand.u32 %v809, 8388607
    %v811 = vor.u32 %v810, 8388608
    %v812 = vsub.s32 0, %v811
    %v813 = vadd.s32 %v808, 1
    %vm814 = vcmp.gt.s32.totalorder %v813, 0
    %v815 = vsel %vm814, %v813, 0
    %v816 = vshrl.u32 %v815, 5
    %v817 = vand.u32 %v815, 31
    %v818 = vsub.s32 32, %v817
    %v819 = vshrl.u32 683565275, %v818
    %v820 = vshll.u32 683565275, %v817
    %v821 = vshrl.u32 2475754826, %v818
    %v822 = vor.u32 %v820, %v821
    %v823 = vshll.u32 2475754826, %v817
    %v824 = vshrl.u32 2131351028, %v818
    %v825 = vor.u32 %v823, %v824
    %v826 = vshll.u32 2131351028, %v817
    %v827 = vshrl.u32 2102212464, %v818
    %v828 = vor.u32 %v826, %v827
    %v829 = vshll.u32 2102212464, %v817
    %v830 = vshrl.u32 920167782, %v818
    %v831 = vor.u32 %v829, %v830
    %v832 = vshll.u32 920167782, %v817
    %v833 = vshrl.u32 1326507024, %v818
    %v834 = vor.u32 %v832, %v833
    %vm835 = vcmp.lt.s32.totalorder %v816, 1
    %vm836 = vcmp.lt.s32.totalorder %v816, 2
    %vm837 = vcmp.lt.s32.totalorder %v816, 3
    %vm838 = vcmp.lt.s32.totalorder %v816, 4
    %v839 = vsel %vm835, %v819, %v822
    %v840 = vsel %vm838, %v828, 2102212464
    %v841 = vsel %vm837, %v825, %v840
    %v842 = vsel %vm836, %v839, %v841
    %v843 = vsel %vm835, %v822, %v825
    %v844 = vsel %vm838, %v831, 920167782
    %v845 = vsel %vm837, %v828, %v844
    %v846 = vsel %vm836, %v843, %v845
    %v847 = vsel %vm835, %v825, %v828
    %v848 = vsel %vm838, %v834, 1326507024
    %v849 = vsel %vm837, %v831, %v848
    %v850 = vsel %vm836, %v847, %v849
    %v851 = vshll.u32 %v811, 8
    %v852 = vmul.u32.u64.compose %v851, %v850
    %v853 = vextract.low.u32 %v852
    %v854 = vextract.high.u32 %v852
    %v855 = vmul.u32.u64.compose %v851, %v846
    %v856 = vextract.low.u32 %v855
    %v857 = vextract.high.u32 %v855
    %v858 = vmul.u32 %v851, %v842
    %v859 = vadd.s32 %v854, %v856
    %vm860 = vc.u32 %v854, %v856
    %v861 = vadd.s32 %v857, 1
    %v862 = vsel %vm860, %v861, %v857
    %v863 = vadd.s32 %v858, %v862
    %v864 = vadd.s32 %v863, 536870912
    %v865 = vshrl.u32 %v864, 30
    %v866 = vshll.u32 %v865, 30
    %v867 = vsub.s32 %v863, %v866
    %vm868 = vcmp.lt.s32.totalorder %v867, 0
    %v869 = vsub.s32 0, %v867
    %v870 = vsel %vm868, %v869, %v867
    %v871 = vclz %v870
    %v872 = vsub.s32 %v871, 2
    %vm873 = vcmp.gt.s32.totalorder 0, %v872
    %v874 = vsel %vm873, 0, %v872
    %v875 = vsub.s32 32, %v874
    %v876 = vshll.u32 %v867, %v874
    %v877 = vshrl.u32 %v859, %v875
    %v878 = vor.u32 %v876, %v877
    %v879 = vsub.s32 4294967266, %v874
    %v880 = vadd.s32 %v879, 127
    %v881 = vshll.u32 %v880, 23
    %v882 = vor.u32 4788187, %v881
    %v883 = vand.u32 2147483647, %v882
    %v885 = vcvt.s32.f32 %v878
    %v886 = vmul.f32 %v885, %v883
    %v887 = vxor.u32 %v886, 2147483648
    %v888 = vsel %vm805, %v887, %v886
    %v889 = vsub.s32 4, %v865
    %v890 = vsel %vm805, %v889, %v865
    %v891 = vsel %vm804, %v593, %v888
    %v892 = vsel %vm804, 0, %v890
    %v893 = vcosq.f32.pop %v891
    %v894 = vsinq.f32.pop %v891
    %vm895 = vweird.f32 %v593
    %v896 = vadd.s32 %v892, 3
    %v897 = vand.u32 %v896, 3
    %vm898 = vcmp.lt.s32.totalorder %v897, 2
    %vm899 = vcmp.eq.s32.totalorder %v897, 0
    %v900 = vxor.u32 %v894, 2147483648
    %v901 = vsel %vm899, %v893, %v900
    %vm902 = vcmp.eq.s32.totalorder %v897, 2
    %v903 = vxor.u32 %v893, 2147483648
    %v904 = vsel %vm902, %v903, %v894
    %v905 = vsel %vm898, %v901, %v904
    %v906 = vsel %vm895, nan, %v905
    %v907 = vand.u32 2147483647, %v594
    %vm908 = vcmp.le.f32.partialorder %v907, 0.7853982
    %vm909 = vcmp.lt.s32.totalorder %v594, 0
    %v910 = vand.u32 %v594, 2139095040
    %v911 = vshrl.u32 %v910, 23
    %v912 = vsub.s32 %v911, 127
    %v913 = vand.u32 2147483647, %v594
    %v914 = vand.u32 %v913, 8388607
    %v915 = vor.u32 %v914, 8388608
    %v916 = vsub.s32 0, %v915
    %v917 = vadd.s32 %v912, 1
    %vm918 = vcmp.gt.s32.totalorder %v917, 0
    %v919 = vsel %vm918, %v917, 0
    %v920 = vshrl.u32 %v919, 5
    %v921 = vand.u32 %v919, 31
    %v922 = vsub.s32 32, %v921
    %v923 = vshrl.u32 683565275, %v922
    %v924 = vshll.u32 683565275, %v921
    %v925 = vshrl.u32 2475754826, %v922
    %v926 = vor.u32 %v924, %v925
    %v927 = vshll.u32 2475754826, %v921
    %v928 = vshrl.u32 2131351028, %v922
    %v929 = vor.u32 %v927, %v928
    %v930 = vshll.u32 2131351028, %v921
    %v931 = vshrl.u32 2102212464, %v922
    %v932 = vor.u32 %v930, %v931
    %v933 = vshll.u32 2102212464, %v921
    %v934 = vshrl.u32 920167782, %v922
    %v935 = vor.u32 %v933, %v934
    %v936 = vshll.u32 920167782, %v921
    %v937 = vshrl.u32 1326507024, %v922
    %v938 = vor.u32 %v936, %v937
    %vm939 = vcmp.lt.s32.totalorder %v920, 1
    %vm940 = vcmp.lt.s32.totalorder %v920, 2
    %vm941 = vcmp.lt.s32.totalorder %v920, 3
    %vm942 = vcmp.lt.s32.totalorder %v920, 4
    %v943 = vsel %vm939, %v923, %v926
    %v944 = vsel %vm942, %v932, 2102212464
    %v945 = vsel %vm941, %v929, %v944
    %v946 = vsel %vm940, %v943, %v945
    %v947 = vsel %vm939, %v926, %v929
    %v948 = vsel %vm942, %v935, 920167782
    %v949 = vsel %vm941, %v932, %v948
    %v950 = vsel %vm940, %v947, %v949
    %v951 = vsel %vm939, %v929, %v932
    %v952 = vsel %vm942, %v938, 1326507024
    %v953 = vsel %vm941, %v935, %v952
    %v954 = vsel %vm940, %v951, %v953
    %v955 = vshll.u32 %v915, 8
    %v956 = vmul.u32.u64.compose %v955, %v954
    %v957 = vextract.low.u32 %v956
    %v958 = vextract.high.u32 %v956
    %v959 = vmul.u32.u64.compose %v955, %v950
    %v960 = vextract.low.u32 %v959
    %v961 = vextract.high.u32 %v959
    %v962 = vmul.u32 %v955, %v946
    %v963 = vadd.s32 %v958, %v960
    %vm964 = vc.u32 %v958, %v960
    %v965 = vadd.s32 %v961, 1
    %v966 = vsel %vm964, %v965, %v961
    %v967 = vadd.s32 %v962, %v966
    %v968 = vadd.s32 %v967, 536870912
    %v969 = vshrl.u32 %v968, 30
    %v970 = vshll.u32 %v969, 30
    %v971 = vsub.s32 %v967, %v970
    %vm972 = vcmp.lt.s32.totalorder %v971, 0
    %v973 = vsub.s32 0, %v971
    %v974 = vsel %vm972, %v973, %v971
    %v975 = vclz %v974
    %v976 = vsub.s32 %v975, 2
    %vm977 = vcmp.gt.s32.totalorder 0, %v976
    %v978 = vsel %vm977, 0, %v976
    %v979 = vsub.s32 32, %v978
    %v980 = vshll.u32 %v971, %v978
    %v981 = vshrl.u32 %v963, %v979
    %v982 = vor.u32 %v980, %v981
    %v983 = vsub.s32 4294967266, %v978
    %v984 = vadd.s32 %v983, 127
    %v985 = vshll.u32 %v984, 23
    %v986 = vor.u32 4788187, %v985
    %v987 = vand.u32 2147483647, %v986
    %v989 = vcvt.s32.f32 %v982
    %v990 = vmul.f32 %v989, %v987
    %v991 = vxor.u32 %v990, 2147483648
    %v992 = vsel %vm909, %v991, %v990
    %v993 = vsub.s32 4, %v969
    %v994 = vsel %vm909, %v993, %v969
    %v995 = vsel %vm908, %v594, %v992
    %v996 = vsel %vm908, 0, %v994
    %v997 = vcosq.f32.pop %v995
    %v998 = vsinq.f32.pop %v995
    %vm999 = vweird.f32 %v594
    %v1000 = vadd.s32 %v996, 3
    %v1001 = vand.u32 %v1000, 3
    %vm1002 = vcmp.lt.s32.totalorder %v1001, 2
    %vm1003 = vcmp.eq.s32.totalorder %v1001, 0
    %v1004 = vxor.u32 %v998, 2147483648
    %v1005 = vsel %vm1003, %v997, %v1004
    %vm1006 = vcmp.eq.s32.totalorder %v1001, 2
    %v1007 = vxor.u32 %v997, 2147483648
    %v1008 = vsel %vm1006, %v1007, %v998
    %v1009 = vsel %vm1002, %v1005, %v1008
    %v1010 = vsel %vm999, nan, %v1009
    %v1011 = vmul.f32 %v698, 0.25
    %v1012 = vmul.f32 %v802, 0.25
    %v1013 = vmul.f32 %v906, 0.25
    %v1014 = vmul.f32 %v1010, 0.25
    %v1015 = vpack.c.bf16 %v1011, %v1011
    %v1016 = vpack.c.bf16 %v1012, %v1012
    %v1017 = vpack.c.bf16 %v1013, %v1013
    %v1018 = vpack.c.bf16 %v1014, %v1014
    %v1019 = vld [vmem:[%s5] sm:$0xff]
    %v1020 = vld [vmem:[%s5 + $0x8] sm:$0xff]
    %v1021 = vld [vmem:[%s5 + $0x10] sm:$0xff]
    %v1022 = vld [vmem:[%s5 + $0x18] sm:$0xff]
    %v1023 = vld [vmem:[%s5 + $0x20] sm:$0xff]
    %v1024 = vld [vmem:[%s5 + $0x28] sm:$0xff]
    %v1025 = vld [vmem:[%s5 + $0x30] sm:$0xff]
    %v1026 = vld [vmem:[%s5 + $0x38] sm:$0xff]
    %v1027 = vld [vmem:[%s5 + $0x40] sm:$0xff]
    %v1028 = vld [vmem:[%s5 + $0x48] sm:$0xff]
    %v1029 = vld [vmem:[%s5 + $0x50] sm:$0xff]
    %v1030 = vld [vmem:[%s5 + $0x58] sm:$0xff]
    %v1031 = vld [vmem:[%s5 + $0x60] sm:$0xff]
    %v1032 = vld [vmem:[%s5 + $0x68] sm:$0xff]
    %v1033 = vld [vmem:[%s5 + $0x70] sm:$0xff]
    %v1034 = vld [vmem:[%s5 + $0x78] sm:$0xff]
    %v1035 = vld [vmem:[%s5 + $0x80] sm:$0xff]
    %v1036 = vld [vmem:[%s5 + $0x88] sm:$0xff]
    %v1037 = vld [vmem:[%s5 + $0x90] sm:$0xff]
    %v1038 = vld [vmem:[%s5 + $0x98] sm:$0xff]
    %v1039 = vld [vmem:[%s5 + $0xa0] sm:$0xff]
    %v1040 = vld [vmem:[%s5 + $0xa8] sm:$0xff]
    %v1041 = vld [vmem:[%s5 + $0xb0] sm:$0xff]
    %v1042 = vld [vmem:[%s5 + $0xb8] sm:$0xff]
    %v1043 = vld [vmem:[%s5 + $0xc0] sm:$0xff]
    %v1044 = vld [vmem:[%s5 + $0xc8] sm:$0xff]
    %v1045 = vld [vmem:[%s5 + $0xd0] sm:$0xff]
    %v1046 = vld [vmem:[%s5 + $0xd8] sm:$0xff]
    %v1047 = vld [vmem:[%s5 + $0xe0] sm:$0xff]
    %v1048 = vld [vmem:[%s5 + $0xe8] sm:$0xff]
    %v1049 = vld [vmem:[%s5 + $0xf0] sm:$0xff]
    %v1050 = vld [vmem:[%s5 + $0xf8] sm:$0xff]
    %v1051 = vld [vmem:[%s5 + $0x100] sm:$0xff]
    %v1052 = vld [vmem:[%s5 + $0x108] sm:$0xff]
    %v1053 = vld [vmem:[%s5 + $0x110] sm:$0xff]
    %v1054 = vld [vmem:[%s5 + $0x118] sm:$0xff]
    %v1055 = vld [vmem:[%s5 + $0x120] sm:$0xff]
    %v1056 = vld [vmem:[%s5 + $0x128] sm:$0xff]
    %v1057 = vld [vmem:[%s5 + $0x130] sm:$0xff]
    %v1058 = vld [vmem:[%s5 + $0x138] sm:$0xff]
    %v1059 = vld [vmem:[%s5 + $0x140] sm:$0xff]
    %v1060 = vld [vmem:[%s5 + $0x148] sm:$0xff]
    %v1061 = vld [vmem:[%s5 + $0x150] sm:$0xff]
    %v1062 = vld [vmem:[%s5 + $0x158] sm:$0xff]
    %v1063 = vld [vmem:[%s5 + $0x160] sm:$0xff]
    %v1064 = vld [vmem:[%s5 + $0x168] sm:$0xff]
    %v1065 = vld [vmem:[%s5 + $0x170] sm:$0xff]
    %v1066 = vld [vmem:[%s5 + $0x178] sm:$0xff]
    %v1067 = vld [vmem:[%s5 + $0x180] sm:$0xff]
    %v1068 = vld [vmem:[%s5 + $0x188] sm:$0xff]
    %v1069 = vld [vmem:[%s5 + $0x190] sm:$0xff]
    %v1070 = vld [vmem:[%s5 + $0x198] sm:$0xff]
    %v1071 = vld [vmem:[%s5 + $0x1a0] sm:$0xff]
    %v1072 = vld [vmem:[%s5 + $0x1a8] sm:$0xff]
    %v1073 = vld [vmem:[%s5 + $0x1b0] sm:$0xff]
    %v1074 = vld [vmem:[%s5 + $0x1b8] sm:$0xff]
    %v1075 = vld [vmem:[%s5 + $0x1c0] sm:$0xff]
    %v1076 = vld [vmem:[%s5 + $0x1c8] sm:$0xff]
    %v1077 = vld [vmem:[%s5 + $0x1d0] sm:$0xff]
    %v1078 = vld [vmem:[%s5 + $0x1d8] sm:$0xff]
    %v1079 = vld [vmem:[%s5 + $0x1e0] sm:$0xff]
    %v1080 = vld [vmem:[%s5 + $0x1e8] sm:$0xff]
    %v1081 = vld [vmem:[%s5 + $0x1f0] sm:$0xff]
    %v1082 = vld [vmem:[%s5 + $0x1f8] sm:$0xff]
    %v1083 = vld [vmem:[%s5 + $0x200] sm:$0xff]
    %v1084 = vld [vmem:[%s5 + $0x208] sm:$0xff]
    %v1085 = vld [vmem:[%s5 + $0x210] sm:$0xff]
    %v1086 = vld [vmem:[%s5 + $0x218] sm:$0xff]
    %v1087 = vld [vmem:[%s5 + $0x220] sm:$0xff]
    %v1088 = vld [vmem:[%s5 + $0x228] sm:$0xff]
    %v1089 = vld [vmem:[%s5 + $0x230] sm:$0xff]
    %v1090 = vld [vmem:[%s5 + $0x238] sm:$0xff]
    %v1091 = vld [vmem:[%s5 + $0x240] sm:$0xff]
    %v1092 = vld [vmem:[%s5 + $0x248] sm:$0xff]
    %v1093 = vld [vmem:[%s5 + $0x250] sm:$0xff]
    %v1094 = vld [vmem:[%s5 + $0x258] sm:$0xff]
    %v1095 = vld [vmem:[%s5 + $0x260] sm:$0xff]
    %v1096 = vld [vmem:[%s5 + $0x268] sm:$0xff]
    %v1097 = vld [vmem:[%s5 + $0x270] sm:$0xff]
    %v1098 = vld [vmem:[%s5 + $0x278] sm:$0xff]
    %v1099 = vld [vmem:[%s5 + $0x280] sm:$0xff]
    %v1100 = vld [vmem:[%s5 + $0x288] sm:$0xff]
    %v1101 = vld [vmem:[%s5 + $0x290] sm:$0xff]
    %v1102 = vld [vmem:[%s5 + $0x298] sm:$0xff]
    %v1103 = vld [vmem:[%s5 + $0x2a0] sm:$0xff]
    %v1104 = vld [vmem:[%s5 + $0x2a8] sm:$0xff]
    %v1105 = vld [vmem:[%s5 + $0x2b0] sm:$0xff]
    %v1106 = vld [vmem:[%s5 + $0x2b8] sm:$0xff]
    %v1107 = vld [vmem:[%s5 + $0x2c0] sm:$0xff]
    %v1108 = vld [vmem:[%s5 + $0x2c8] sm:$0xff]
    %v1109 = vld [vmem:[%s5 + $0x2d0] sm:$0xff]
    %v1110 = vld [vmem:[%s5 + $0x2d8] sm:$0xff]
    %v1111 = vld [vmem:[%s5 + $0x2e0] sm:$0xff]
    %v1112 = vld [vmem:[%s5 + $0x2e8] sm:$0xff]
    %v1113 = vld [vmem:[%s5 + $0x2f0] sm:$0xff]
    %v1114 = vld [vmem:[%s5 + $0x2f8] sm:$0xff]
    %v1115 = vld [vmem:[%s5 + $0x300] sm:$0xff]
    %v1116 = vld [vmem:[%s5 + $0x308] sm:$0xff]
    %v1117 = vld [vmem:[%s5 + $0x310] sm:$0xff]
    %v1118 = vld [vmem:[%s5 + $0x318] sm:$0xff]
    %v1119 = vld [vmem:[%s5 + $0x320] sm:$0xff]
    %v1120 = vld [vmem:[%s5 + $0x328] sm:$0xff]
    %v1121 = vld [vmem:[%s5 + $0x330] sm:$0xff]
    %v1122 = vld [vmem:[%s5 + $0x338] sm:$0xff]
    %v1123 = vld [vmem:[%s5 + $0x340] sm:$0xff]
    %v1124 = vld [vmem:[%s5 + $0x348] sm:$0xff]
    %v1125 = vld [vmem:[%s5 + $0x350] sm:$0xff]
    %v1126 = vld [vmem:[%s5 + $0x358] sm:$0xff]
    %v1127 = vld [vmem:[%s5 + $0x360] sm:$0xff]
    %v1128 = vld [vmem:[%s5 + $0x368] sm:$0xff]
    %v1129 = vld [vmem:[%s5 + $0x370] sm:$0xff]
    %v1130 = vld [vmem:[%s5 + $0x378] sm:$0xff]
    %v1131 = vld [vmem:[%s5 + $0x380] sm:$0xff]
    %v1132 = vld [vmem:[%s5 + $0x388] sm:$0xff]
    %v1133 = vld [vmem:[%s5 + $0x390] sm:$0xff]
    %v1134 = vld [vmem:[%s5 + $0x398] sm:$0xff]
    %v1135 = vld [vmem:[%s5 + $0x3a0] sm:$0xff]
    %v1136 = vld [vmem:[%s5 + $0x3a8] sm:$0xff]
    %v1137 = vld [vmem:[%s5 + $0x3b0] sm:$0xff]
    %v1138 = vld [vmem:[%s5 + $0x3b8] sm:$0xff]
    %v1139 = vld [vmem:[%s5 + $0x3c0] sm:$0xff]
    %v1140 = vld [vmem:[%s5 + $0x3c8] sm:$0xff]
    %v1141 = vld [vmem:[%s5 + $0x3d0] sm:$0xff]
    %v1142 = vld [vmem:[%s5 + $0x3d8] sm:$0xff]
    %v1143 = vld [vmem:[%s5 + $0x3e0] sm:$0xff]
    %v1144 = vld [vmem:[%s5 + $0x3e8] sm:$0xff]
    %v1145 = vld [vmem:[%s5 + $0x3f0] sm:$0xff]
    %v1146 = vld [vmem:[%s5 + $0x3f8] sm:$0xff]
    %v1275 = vunpack.c.l.b16 %v1019
    %v1276 = vunpack.c.h.b16 %v1019
    %v1277 = vunpack.c.l.b16 %v1020
    %v1278 = vunpack.c.h.b16 %v1020
    %v1279 = vunpack.c.l.b16 %v1021
    %v1280 = vunpack.c.h.b16 %v1021
    %v1281 = vunpack.c.l.b16 %v1022
    %v1282 = vunpack.c.h.b16 %v1022
    %v1283 = vunpack.c.l.b16 %v1023
    %v1284 = vunpack.c.h.b16 %v1023
    %v1285 = vunpack.c.l.b16 %v1024
    %v1286 = vunpack.c.h.b16 %v1024
    %v1287 = vunpack.c.l.b16 %v1025
    %v1288 = vunpack.c.h.b16 %v1025
    %v1289 = vunpack.c.l.b16 %v1026
    %v1290 = vunpack.c.h.b16 %v1026
    %v1291 = vunpack.c.l.b16 %v1027
    %v1292 = vunpack.c.h.b16 %v1027
    %v1293 = vunpack.c.l.b16 %v1028
    %v1294 = vunpack.c.h.b16 %v1028
    %v1295 = vunpack.c.l.b16 %v1029
    %v1296 = vunpack.c.h.b16 %v1029
    %v1297 = vunpack.c.l.b16 %v1030
    %v1298 = vunpack.c.h.b16 %v1030
    %v1299 = vunpack.c.l.b16 %v1031
    %v1300 = vunpack.c.h.b16 %v1031
    %v1301 = vunpack.c.l.b16 %v1032
    %v1302 = vunpack.c.h.b16 %v1032
    %v1303 = vunpack.c.l.b16 %v1033
    %v1304 = vunpack.c.h.b16 %v1033
    %v1305 = vunpack.c.l.b16 %v1034
    %v1306 = vunpack.c.h.b16 %v1034
    %v1307 = vunpack.c.l.b16 %v1035
    %v1308 = vunpack.c.h.b16 %v1035
    %v1309 = vunpack.c.l.b16 %v1036
    %v1310 = vunpack.c.h.b16 %v1036
    %v1311 = vunpack.c.l.b16 %v1037
    %v1312 = vunpack.c.h.b16 %v1037
    %v1313 = vunpack.c.l.b16 %v1038
    %v1314 = vunpack.c.h.b16 %v1038
    %v1315 = vunpack.c.l.b16 %v1039
    %v1316 = vunpack.c.h.b16 %v1039
    %v1317 = vunpack.c.l.b16 %v1040
    %v1318 = vunpack.c.h.b16 %v1040
    %v1319 = vunpack.c.l.b16 %v1041
    %v1320 = vunpack.c.h.b16 %v1041
    %v1321 = vunpack.c.l.b16 %v1042
    %v1322 = vunpack.c.h.b16 %v1042
    %v1323 = vunpack.c.l.b16 %v1043
    %v1324 = vunpack.c.h.b16 %v1043
    %v1325 = vunpack.c.l.b16 %v1044
    %v1326 = vunpack.c.h.b16 %v1044
    %v1327 = vunpack.c.l.b16 %v1045
    %v1328 = vunpack.c.h.b16 %v1045
    %v1329 = vunpack.c.l.b16 %v1046
    %v1330 = vunpack.c.h.b16 %v1046
    %v1331 = vunpack.c.l.b16 %v1047
    %v1332 = vunpack.c.h.b16 %v1047
    %v1333 = vunpack.c.l.b16 %v1048
    %v1334 = vunpack.c.h.b16 %v1048
    %v1335 = vunpack.c.l.b16 %v1049
    %v1336 = vunpack.c.h.b16 %v1049
    %v1337 = vunpack.c.l.b16 %v1050
    %v1338 = vunpack.c.h.b16 %v1050
    %v1339 = vunpack.c.l.b16 %v1051
    %v1340 = vunpack.c.h.b16 %v1051
    %v1341 = vunpack.c.l.b16 %v1052
    %v1342 = vunpack.c.h.b16 %v1052
    %v1343 = vunpack.c.l.b16 %v1053
    %v1344 = vunpack.c.h.b16 %v1053
    %v1345 = vunpack.c.l.b16 %v1054
    %v1346 = vunpack.c.h.b16 %v1054
    %v1347 = vunpack.c.l.b16 %v1055
    %v1348 = vunpack.c.h.b16 %v1055
    %v1349 = vunpack.c.l.b16 %v1056
    %v1350 = vunpack.c.h.b16 %v1056
    %v1351 = vunpack.c.l.b16 %v1057
    %v1352 = vunpack.c.h.b16 %v1057
    %v1353 = vunpack.c.l.b16 %v1058
    %v1354 = vunpack.c.h.b16 %v1058
    %v1355 = vunpack.c.l.b16 %v1059
    %v1356 = vunpack.c.h.b16 %v1059
    %v1357 = vunpack.c.l.b16 %v1060
    %v1358 = vunpack.c.h.b16 %v1060
    %v1359 = vunpack.c.l.b16 %v1061
    %v1360 = vunpack.c.h.b16 %v1061
    %v1361 = vunpack.c.l.b16 %v1062
    %v1362 = vunpack.c.h.b16 %v1062
    %v1363 = vunpack.c.l.b16 %v1063
    %v1364 = vunpack.c.h.b16 %v1063
    %v1365 = vunpack.c.l.b16 %v1064
    %v1366 = vunpack.c.h.b16 %v1064
    %v1367 = vunpack.c.l.b16 %v1065
    %v1368 = vunpack.c.h.b16 %v1065
    %v1369 = vunpack.c.l.b16 %v1066
    %v1370 = vunpack.c.h.b16 %v1066
    %v1371 = vunpack.c.l.b16 %v1067
    %v1372 = vunpack.c.h.b16 %v1067
    %v1373 = vunpack.c.l.b16 %v1068
    %v1374 = vunpack.c.h.b16 %v1068
    %v1375 = vunpack.c.l.b16 %v1069
    %v1376 = vunpack.c.h.b16 %v1069
    %v1377 = vunpack.c.l.b16 %v1070
    %v1378 = vunpack.c.h.b16 %v1070
    %v1379 = vunpack.c.l.b16 %v1071
    %v1380 = vunpack.c.h.b16 %v1071
    %v1381 = vunpack.c.l.b16 %v1072
    %v1382 = vunpack.c.h.b16 %v1072
    %v1383 = vunpack.c.l.b16 %v1073
    %v1384 = vunpack.c.h.b16 %v1073
    %v1385 = vunpack.c.l.b16 %v1074
    %v1386 = vunpack.c.h.b16 %v1074
    %v1387 = vunpack.c.l.b16 %v1075
    %v1388 = vunpack.c.h.b16 %v1075
    %v1389 = vunpack.c.l.b16 %v1076
    %v1390 = vunpack.c.h.b16 %v1076
    %v1391 = vunpack.c.l.b16 %v1077
    %v1392 = vunpack.c.h.b16 %v1077
    %v1393 = vunpack.c.l.b16 %v1078
    %v1394 = vunpack.c.h.b16 %v1078
    %v1395 = vunpack.c.l.b16 %v1079
    %v1396 = vunpack.c.h.b16 %v1079
    %v1397 = vunpack.c.l.b16 %v1080
    %v1398 = vunpack.c.h.b16 %v1080
    %v1399 = vunpack.c.l.b16 %v1081
    %v1400 = vunpack.c.h.b16 %v1081
    %v1401 = vunpack.c.l.b16 %v1082
    %v1402 = vunpack.c.h.b16 %v1082
    %v1403 = vunpack.c.l.b16 %v1083
    %v1404 = vunpack.c.h.b16 %v1083
    %v1405 = vunpack.c.l.b16 %v1084
    %v1406 = vunpack.c.h.b16 %v1084
    %v1407 = vunpack.c.l.b16 %v1085
    %v1408 = vunpack.c.h.b16 %v1085
    %v1409 = vunpack.c.l.b16 %v1086
    %v1410 = vunpack.c.h.b16 %v1086
    %v1411 = vunpack.c.l.b16 %v1087
    %v1412 = vunpack.c.h.b16 %v1087
    %v1413 = vunpack.c.l.b16 %v1088
    %v1414 = vunpack.c.h.b16 %v1088
    %v1415 = vunpack.c.l.b16 %v1089
    %v1416 = vunpack.c.h.b16 %v1089
    %v1417 = vunpack.c.l.b16 %v1090
    %v1418 = vunpack.c.h.b16 %v1090
    %v1419 = vunpack.c.l.b16 %v1091
    %v1420 = vunpack.c.h.b16 %v1091
    %v1421 = vunpack.c.l.b16 %v1092
    %v1422 = vunpack.c.h.b16 %v1092
    %v1423 = vunpack.c.l.b16 %v1093
    %v1424 = vunpack.c.h.b16 %v1093
    %v1425 = vunpack.c.l.b16 %v1094
    %v1426 = vunpack.c.h.b16 %v1094
    %v1427 = vunpack.c.l.b16 %v1095
    %v1428 = vunpack.c.h.b16 %v1095
    %v1429 = vunpack.c.l.b16 %v1096
    %v1430 = vunpack.c.h.b16 %v1096
    %v1431 = vunpack.c.l.b16 %v1097
    %v1432 = vunpack.c.h.b16 %v1097
    %v1433 = vunpack.c.l.b16 %v1098
    %v1434 = vunpack.c.h.b16 %v1098
    %v1435 = vunpack.c.l.b16 %v1099
    %v1436 = vunpack.c.h.b16 %v1099
    %v1437 = vunpack.c.l.b16 %v1100
    %v1438 = vunpack.c.h.b16 %v1100
    %v1439 = vunpack.c.l.b16 %v1101
    %v1440 = vunpack.c.h.b16 %v1101
    %v1441 = vunpack.c.l.b16 %v1102
    %v1442 = vunpack.c.h.b16 %v1102
    %v1443 = vunpack.c.l.b16 %v1103
    %v1444 = vunpack.c.h.b16 %v1103
    %v1445 = vunpack.c.l.b16 %v1104
    %v1446 = vunpack.c.h.b16 %v1104
    %v1447 = vunpack.c.l.b16 %v1105
    %v1448 = vunpack.c.h.b16 %v1105
    %v1449 = vunpack.c.l.b16 %v1106
    %v1450 = vunpack.c.h.b16 %v1106
    %v1451 = vunpack.c.l.b16 %v1107
    %v1452 = vunpack.c.h.b16 %v1107
    %v1453 = vunpack.c.l.b16 %v1108
    %v1454 = vunpack.c.h.b16 %v1108
    %v1455 = vunpack.c.l.b16 %v1109
    %v1456 = vunpack.c.h.b16 %v1109
    %v1457 = vunpack.c.l.b16 %v1110
    %v1458 = vunpack.c.h.b16 %v1110
    %v1459 = vunpack.c.l.b16 %v1111
    %v1460 = vunpack.c.h.b16 %v1111
    %v1461 = vunpack.c.l.b16 %v1112
    %v1462 = vunpack.c.h.b16 %v1112
    %v1463 = vunpack.c.l.b16 %v1113
    %v1464 = vunpack.c.h.b16 %v1113
    %v1465 = vunpack.c.l.b16 %v1114
    %v1466 = vunpack.c.h.b16 %v1114
    %v1467 = vunpack.c.l.b16 %v1115
    %v1468 = vunpack.c.h.b16 %v1115
    %v1469 = vunpack.c.l.b16 %v1116
    %v1470 = vunpack.c.h.b16 %v1116
    %v1471 = vunpack.c.l.b16 %v1117
    %v1472 = vunpack.c.h.b16 %v1117
    %v1473 = vunpack.c.l.b16 %v1118
    %v1474 = vunpack.c.h.b16 %v1118
    %v1475 = vunpack.c.l.b16 %v1119
    %v1476 = vunpack.c.h.b16 %v1119
    %v1477 = vunpack.c.l.b16 %v1120
    %v1478 = vunpack.c.h.b16 %v1120
    %v1479 = vunpack.c.l.b16 %v1121
    %v1480 = vunpack.c.h.b16 %v1121
    %v1481 = vunpack.c.l.b16 %v1122
    %v1482 = vunpack.c.h.b16 %v1122
    %v1483 = vunpack.c.l.b16 %v1123
    %v1484 = vunpack.c.h.b16 %v1123
    %v1485 = vunpack.c.l.b16 %v1124
    %v1486 = vunpack.c.h.b16 %v1124
    %v1487 = vunpack.c.l.b16 %v1125
    %v1488 = vunpack.c.h.b16 %v1125
    %v1489 = vunpack.c.l.b16 %v1126
    %v1490 = vunpack.c.h.b16 %v1126
    %v1491 = vunpack.c.l.b16 %v1127
    %v1492 = vunpack.c.h.b16 %v1127
    %v1493 = vunpack.c.l.b16 %v1128
    %v1494 = vunpack.c.h.b16 %v1128
    %v1495 = vunpack.c.l.b16 %v1129
    %v1496 = vunpack.c.h.b16 %v1129
    %v1497 = vunpack.c.l.b16 %v1130
    %v1498 = vunpack.c.h.b16 %v1130
    %v1499 = vunpack.c.l.b16 %v1131
    %v1500 = vunpack.c.h.b16 %v1131
    %v1501 = vunpack.c.l.b16 %v1132
    %v1502 = vunpack.c.h.b16 %v1132
    %v1503 = vunpack.c.l.b16 %v1133
    %v1504 = vunpack.c.h.b16 %v1133
    %v1505 = vunpack.c.l.b16 %v1134
    %v1506 = vunpack.c.h.b16 %v1134
    %v1507 = vunpack.c.l.b16 %v1135
    %v1508 = vunpack.c.h.b16 %v1135
    %v1509 = vunpack.c.l.b16 %v1136
    %v1510 = vunpack.c.h.b16 %v1136
    %v1511 = vunpack.c.l.b16 %v1137
    %v1512 = vunpack.c.h.b16 %v1137
    %v1513 = vunpack.c.l.b16 %v1138
    %v1514 = vunpack.c.h.b16 %v1138
    %v1515 = vunpack.c.l.b16 %v1139
    %v1516 = vunpack.c.h.b16 %v1139
    %v1517 = vunpack.c.l.b16 %v1140
    %v1518 = vunpack.c.h.b16 %v1140
    %v1519 = vunpack.c.l.b16 %v1141
    %v1520 = vunpack.c.h.b16 %v1141
    %v1521 = vunpack.c.l.b16 %v1142
    %v1522 = vunpack.c.h.b16 %v1142
    %v1523 = vunpack.c.l.b16 %v1143
    %v1524 = vunpack.c.h.b16 %v1143
    %v1525 = vunpack.c.l.b16 %v1144
    %v1526 = vunpack.c.h.b16 %v1144
    %v1527 = vunpack.c.l.b16 %v1145
    %v1528 = vunpack.c.h.b16 %v1145
    %v1529 = vunpack.c.l.b16 %v1146
    %v1530 = vunpack.c.h.b16 %v1146
    %v1531 = vpack.c.b16 %v1279, %v1275
    %v1532 = vpack.c.b16 %v1280, %v1276
    %v1533 = vpack.c.b16 %v1281, %v1277
    %v1534 = vpack.c.b16 %v1282, %v1278
    %v1535 = vpack.c.b16 %v1287, %v1283
    %v1536 = vpack.c.b16 %v1288, %v1284
    %v1537 = vpack.c.b16 %v1289, %v1285
    %v1538 = vpack.c.b16 %v1290, %v1286
    %v1539 = vpack.c.b16 %v1295, %v1291
    %v1540 = vpack.c.b16 %v1296, %v1292
    %v1541 = vpack.c.b16 %v1297, %v1293
    %v1542 = vpack.c.b16 %v1298, %v1294
    %v1543 = vpack.c.b16 %v1303, %v1299
    %v1544 = vpack.c.b16 %v1304, %v1300
    %v1545 = vpack.c.b16 %v1305, %v1301
    %v1546 = vpack.c.b16 %v1306, %v1302
    %v1547 = vpack.c.b16 %v1311, %v1307
    %v1548 = vpack.c.b16 %v1312, %v1308
    %v1549 = vpack.c.b16 %v1313, %v1309
    %v1550 = vpack.c.b16 %v1314, %v1310
    %v1551 = vpack.c.b16 %v1319, %v1315
    %v1552 = vpack.c.b16 %v1320, %v1316
    %v1553 = vpack.c.b16 %v1321, %v1317
    %v1554 = vpack.c.b16 %v1322, %v1318
    %v1555 = vpack.c.b16 %v1327, %v1323
    %v1556 = vpack.c.b16 %v1328, %v1324
    %v1557 = vpack.c.b16 %v1329, %v1325
    %v1558 = vpack.c.b16 %v1330, %v1326
    %v1559 = vpack.c.b16 %v1335, %v1331
    %v1560 = vpack.c.b16 %v1336, %v1332
    %v1561 = vpack.c.b16 %v1337, %v1333
    %v1562 = vpack.c.b16 %v1338, %v1334
    %v1563 = vpack.c.b16 %v1343, %v1339
    %v1564 = vpack.c.b16 %v1344, %v1340
    %v1565 = vpack.c.b16 %v1345, %v1341
    %v1566 = vpack.c.b16 %v1346, %v1342
    %v1567 = vpack.c.b16 %v1351, %v1347
    %v1568 = vpack.c.b16 %v1352, %v1348
    %v1569 = vpack.c.b16 %v1353, %v1349
    %v1570 = vpack.c.b16 %v1354, %v1350
    %v1571 = vpack.c.b16 %v1359, %v1355
    %v1572 = vpack.c.b16 %v1360, %v1356
    %v1573 = vpack.c.b16 %v1361, %v1357
    %v1574 = vpack.c.b16 %v1362, %v1358
    %v1575 = vpack.c.b16 %v1367, %v1363
    %v1576 = vpack.c.b16 %v1368, %v1364
    %v1577 = vpack.c.b16 %v1369, %v1365
    %v1578 = vpack.c.b16 %v1370, %v1366
    %v1579 = vpack.c.b16 %v1375, %v1371
    %v1580 = vpack.c.b16 %v1376, %v1372
    %v1581 = vpack.c.b16 %v1377, %v1373
    %v1582 = vpack.c.b16 %v1378, %v1374
    %v1583 = vpack.c.b16 %v1383, %v1379
    %v1584 = vpack.c.b16 %v1384, %v1380
    %v1585 = vpack.c.b16 %v1385, %v1381
    %v1586 = vpack.c.b16 %v1386, %v1382
    %v1587 = vpack.c.b16 %v1391, %v1387
    %v1588 = vpack.c.b16 %v1392, %v1388
    %v1589 = vpack.c.b16 %v1393, %v1389
    %v1590 = vpack.c.b16 %v1394, %v1390
    %v1591 = vpack.c.b16 %v1399, %v1395
    %v1592 = vpack.c.b16 %v1400, %v1396
    %v1593 = vpack.c.b16 %v1401, %v1397
    %v1594 = vpack.c.b16 %v1402, %v1398
    %v1595 = vpack.c.b16 %v1407, %v1403
    %v1596 = vpack.c.b16 %v1408, %v1404
    %v1597 = vpack.c.b16 %v1409, %v1405
    %v1598 = vpack.c.b16 %v1410, %v1406
    %v1599 = vpack.c.b16 %v1415, %v1411
    %v1600 = vpack.c.b16 %v1416, %v1412
    %v1601 = vpack.c.b16 %v1417, %v1413
    %v1602 = vpack.c.b16 %v1418, %v1414
    %v1603 = vpack.c.b16 %v1423, %v1419
    %v1604 = vpack.c.b16 %v1424, %v1420
    %v1605 = vpack.c.b16 %v1425, %v1421
    %v1606 = vpack.c.b16 %v1426, %v1422
    %v1607 = vpack.c.b16 %v1431, %v1427
    %v1608 = vpack.c.b16 %v1432, %v1428
    %v1609 = vpack.c.b16 %v1433, %v1429
    %v1610 = vpack.c.b16 %v1434, %v1430
    %v1611 = vpack.c.b16 %v1439, %v1435
    %v1612 = vpack.c.b16 %v1440, %v1436
    %v1613 = vpack.c.b16 %v1441, %v1437
    %v1614 = vpack.c.b16 %v1442, %v1438
    %v1615 = vpack.c.b16 %v1447, %v1443
    %v1616 = vpack.c.b16 %v1448, %v1444
    %v1617 = vpack.c.b16 %v1449, %v1445
    %v1618 = vpack.c.b16 %v1450, %v1446
    %v1619 = vpack.c.b16 %v1455, %v1451
    %v1620 = vpack.c.b16 %v1456, %v1452
    %v1621 = vpack.c.b16 %v1457, %v1453
    %v1622 = vpack.c.b16 %v1458, %v1454
    %v1623 = vpack.c.b16 %v1463, %v1459
    %v1624 = vpack.c.b16 %v1464, %v1460
    %v1625 = vpack.c.b16 %v1465, %v1461
    %v1626 = vpack.c.b16 %v1466, %v1462
    %v1627 = vpack.c.b16 %v1471, %v1467
    %v1628 = vpack.c.b16 %v1472, %v1468
    %v1629 = vpack.c.b16 %v1473, %v1469
    %v1630 = vpack.c.b16 %v1474, %v1470
    %v1631 = vpack.c.b16 %v1479, %v1475
    %v1632 = vpack.c.b16 %v1480, %v1476
    %v1633 = vpack.c.b16 %v1481, %v1477
    %v1634 = vpack.c.b16 %v1482, %v1478
    %v1635 = vpack.c.b16 %v1487, %v1483
    %v1636 = vpack.c.b16 %v1488, %v1484
    %v1637 = vpack.c.b16 %v1489, %v1485
    %v1638 = vpack.c.b16 %v1490, %v1486
    %v1639 = vpack.c.b16 %v1495, %v1491
    %v1640 = vpack.c.b16 %v1496, %v1492
    %v1641 = vpack.c.b16 %v1497, %v1493
    %v1642 = vpack.c.b16 %v1498, %v1494
    %v1643 = vpack.c.b16 %v1503, %v1499
    %v1644 = vpack.c.b16 %v1504, %v1500
    %v1645 = vpack.c.b16 %v1505, %v1501
    %v1646 = vpack.c.b16 %v1506, %v1502
    %v1647 = vpack.c.b16 %v1511, %v1507
    %v1648 = vpack.c.b16 %v1512, %v1508
    %v1649 = vpack.c.b16 %v1513, %v1509
    %v1650 = vpack.c.b16 %v1514, %v1510
    %v1651 = vpack.c.b16 %v1519, %v1515
    %v1652 = vpack.c.b16 %v1520, %v1516
    %v1653 = vpack.c.b16 %v1521, %v1517
    %v1654 = vpack.c.b16 %v1522, %v1518
    %v1655 = vpack.c.b16 %v1527, %v1523
    %v1656 = vpack.c.b16 %v1528, %v1524
    %v1657 = vpack.c.b16 %v1529, %v1525
    %v1658 = vpack.c.b16 %v1530, %v1526
    %1787 = vmatprep.subr.bf16.mxu0 %v1532
    %1788 = vmatpush1.bf16.msra.mxu0 %v1531
    %1789 = vmatprep.subr.bf16.mxu0 %v1536
    %1790 = vmatpush1.bf16.msra.mxu0 %v1535
    %1791 = vmatprep.subr.bf16.mxu0 %v1540
    %1792 = vmatpush1.bf16.msra.mxu0 %v1539
    %1793 = vmatprep.subr.bf16.mxu0 %v1544
    %1794 = vmatpush1.bf16.msra.mxu0 %v1543
    %1795 = vmatprep.subr.bf16.mxu0 %v1548
    %1796 = vmatpush1.bf16.msra.mxu0 %v1547
    %1797 = vmatprep.subr.bf16.mxu0 %v1552
    %1798 = vmatpush1.bf16.msra.mxu0 %v1551
    %1799 = vmatprep.subr.bf16.mxu0 %v1556
    %1800 = vmatpush1.bf16.msra.mxu0 %v1555
    %1801 = vmatprep.subr.bf16.mxu0 %v1560
    %1802 = vmatpush1.bf16.msra.mxu0 %v1559
    %1803 = vmatprep.subr.bf16.mxu0 %v1564
    %1804 = vmatpush1.bf16.msra.mxu0 %v1563
    %1805 = vmatprep.subr.bf16.mxu0 %v1568
    %1806 = vmatpush1.bf16.msra.mxu0 %v1567
    %1807 = vmatprep.subr.bf16.mxu0 %v1572
    %1808 = vmatpush1.bf16.msra.mxu0 %v1571
    %1809 = vmatprep.subr.bf16.mxu0 %v1576
    %1810 = vmatpush1.bf16.msra.mxu0 %v1575
    %1811 = vmatprep.subr.bf16.mxu0 %v1580
    %1812 = vmatpush1.bf16.msra.mxu0 %v1579
    %1813 = vmatprep.subr.bf16.mxu0 %v1584
    %1814 = vmatpush1.bf16.msra.mxu0 %v1583
    %1815 = vmatprep.subr.bf16.mxu0 %v1588
    %1816 = vmatpush1.bf16.msra.mxu0 %v1587
    %1817 = vmatprep.subr.bf16.mxu0 %v1592
    %1818 = vmatpush1.bf16.msra.mxu0 %v1591
    %1819 = vmatprep.mubr.bf16.mxu0 %v1016
    %1820 = vmatmul.mubr.bf16.gmra.mrb[0].mxu0 %v1015
    %v1821 = vpop.f32.mrb[0].mxu0
    %v1822 = vadd.f32 0.0, %v1821
    %v1823 = vpop.f32.mrb[0].mxu0
    %v1824 = vadd.f32 0.0, %v1823
    %v1825 = vpop.f32.mrb[0].mxu0
    %v1826 = vpop.f32.mrb[0].mxu0
    %1827 = vdwg.mxu0
    %1828 = vmatprep.subr.bf16.mxu0 %v1596
    %1829 = vmatpush1.bf16.msra.mxu0 %v1595
    %1830 = vmatprep.subr.bf16.mxu0 %v1600
    %1831 = vmatpush1.bf16.msra.mxu0 %v1599
    %1832 = vmatprep.subr.bf16.mxu0 %v1604
    %1833 = vmatpush1.bf16.msra.mxu0 %v1603
    %1834 = vmatprep.subr.bf16.mxu0 %v1608
    %1835 = vmatpush1.bf16.msra.mxu0 %v1607
    %1836 = vmatprep.subr.bf16.mxu0 %v1612
    %1837 = vmatpush1.bf16.msra.mxu0 %v1611
    %1838 = vmatprep.subr.bf16.mxu0 %v1616
    %1839 = vmatpush1.bf16.msra.mxu0 %v1615
    %1840 = vmatprep.subr.bf16.mxu0 %v1620
    %1841 = vmatpush1.bf16.msra.mxu0 %v1619
    %1842 = vmatprep.subr.bf16.mxu0 %v1624
    %1843 = vmatpush1.bf16.msra.mxu0 %v1623
    %1844 = vmatprep.subr.bf16.mxu0 %v1628
    %1845 = vmatpush1.bf16.msra.mxu0 %v1627
    %1846 = vmatprep.subr.bf16.mxu0 %v1632
    %1847 = vmatpush1.bf16.msra.mxu0 %v1631
    %1848 = vmatprep.subr.bf16.mxu0 %v1636
    %1849 = vmatpush1.bf16.msra.mxu0 %v1635
    %1850 = vmatprep.subr.bf16.mxu0 %v1640
    %1851 = vmatpush1.bf16.msra.mxu0 %v1639
    %1852 = vmatprep.subr.bf16.mxu0 %v1644
    %1853 = vmatpush1.bf16.msra.mxu0 %v1643
    %1854 = vmatprep.subr.bf16.mxu0 %v1648
    %1855 = vmatpush1.bf16.msra.mxu0 %v1647
    %1856 = vmatprep.subr.bf16.mxu0 %v1652
    %1857 = vmatpush1.bf16.msra.mxu0 %v1651
    %1858 = vmatprep.subr.bf16.mxu0 %v1656
    %1859 = vmatpush1.bf16.msra.mxu0 %v1655
    %1860 = vmatprep.mubr.bf16.mxu0 %v1018
    %1861 = vmatmul.mubr.bf16.gmra.mrb[0].mxu0 %v1017
    %v1862 = vpop.f32.mrb[0].mxu0
    %v1863 = vadd.f32 %v1822, %v1862
    %v1864 = vpop.f32.mrb[0].mxu0
    %v1865 = vadd.f32 %v1824, %v1864
    %v1866 = vpop.f32.mrb[0].mxu0
    %v1867 = vpop.f32.mrb[0].mxu0
    %1868 = vdwg.mxu0
    %1869 = vmatprep.subr.bf16.mxu0 %v1534
    %1870 = vmatpush1.bf16.msra.mxu0 %v1533
    %1871 = vmatprep.subr.bf16.mxu0 %v1538
    %1872 = vmatpush1.bf16.msra.mxu0 %v1537
    %1873 = vmatprep.subr.bf16.mxu0 %v1542
    %1874 = vmatpush1.bf16.msra.mxu0 %v1541
    %1875 = vmatprep.subr.bf16.mxu0 %v1546
    %1876 = vmatpush1.bf16.msra.mxu0 %v1545
    %1877 = vmatprep.subr.bf16.mxu0 %v1550
    %1878 = vmatpush1.bf16.msra.mxu0 %v1549
    %1879 = vmatprep.subr.bf16.mxu0 %v1554
    %1880 = vmatpush1.bf16.msra.mxu0 %v1553
    %1881 = vmatprep.subr.bf16.mxu0 %v1558
    %1882 = vmatpush1.bf16.msra.mxu0 %v1557
    %1883 = vmatprep.subr.bf16.mxu0 %v1562
    %1884 = vmatpush1.bf16.msra.mxu0 %v1561
    %1885 = vmatprep.subr.bf16.mxu0 %v1566
    %1886 = vmatpush1.bf16.msra.mxu0 %v1565
    %1887 = vmatprep.subr.bf16.mxu0 %v1570
    %1888 = vmatpush1.bf16.msra.mxu0 %v1569
    %1889 = vmatprep.subr.bf16.mxu0 %v1574
    %1890 = vmatpush1.bf16.msra.mxu0 %v1573
    %1891 = vmatprep.subr.bf16.mxu0 %v1578
    %1892 = vmatpush1.bf16.msra.mxu0 %v1577
    %1893 = vmatprep.subr.bf16.mxu0 %v1582
    %1894 = vmatpush1.bf16.msra.mxu0 %v1581
    %1895 = vmatprep.subr.bf16.mxu0 %v1586
    %1896 = vmatpush1.bf16.msra.mxu0 %v1585
    %1897 = vmatprep.subr.bf16.mxu0 %v1590
    %1898 = vmatpush1.bf16.msra.mxu0 %v1589
    %1899 = vmatprep.subr.bf16.mxu0 %v1594
    %1900 = vmatpush1.bf16.msra.mxu0 %v1593
    %1901 = vmatprep.mubr.bf16.mxu0 %v1016
    %1902 = vmatmul.mubr.bf16.gmra.mrb[0].mxu0 %v1015
    %v1903 = vpop.f32.mrb[0].mxu0
    %v1904 = vadd.f32 0.0, %v1903
    %v1905 = vpop.f32.mrb[0].mxu0
    %v1906 = vadd.f32 0.0, %v1905
    %v1907 = vpop.f32.mrb[0].mxu0
    %v1908 = vpop.f32.mrb[0].mxu0
    %1909 = vdwg.mxu0
    %1910 = vmatprep.subr.bf16.mxu0 %v1598
    %1911 = vmatpush1.bf16.msra.mxu0 %v1597
    %1912 = vmatprep.subr.bf16.mxu0 %v1602
    %1913 = vmatpush1.bf16.msra.mxu0 %v1601
    %1914 = vmatprep.subr.bf16.mxu0 %v1606
    %1915 = vmatpush1.bf16.msra.mxu0 %v1605
    %1916 = vmatprep.subr.bf16.mxu0 %v1610
    %1917 = vmatpush1.bf16.msra.mxu0 %v1609
    %1918 = vmatprep.subr.bf16.mxu0 %v1614
    %1919 = vmatpush1.bf16.msra.mxu0 %v1613
    %1920 = vmatprep.subr.bf16.mxu0 %v1618
    %1921 = vmatpush1.bf16.msra.mxu0 %v1617
    %1922 = vmatprep.subr.bf16.mxu0 %v1622
    %1923 = vmatpush1.bf16.msra.mxu0 %v1621
    %1924 = vmatprep.subr.bf16.mxu0 %v1626
    %1925 = vmatpush1.bf16.msra.mxu0 %v1625
    %1926 = vmatprep.subr.bf16.mxu0 %v1630
    %1927 = vmatpush1.bf16.msra.mxu0 %v1629
    %1928 = vmatprep.subr.bf16.mxu0 %v1634
    %1929 = vmatpush1.bf16.msra.mxu0 %v1633
    %1930 = vmatprep.subr.bf16.mxu0 %v1638
    %1931 = vmatpush1.bf16.msra.mxu0 %v1637
    %1932 = vmatprep.subr.bf16.mxu0 %v1642
    %1933 = vmatpush1.bf16.msra.mxu0 %v1641
    %1934 = vmatprep.subr.bf16.mxu0 %v1646
    %1935 = vmatpush1.bf16.msra.mxu0 %v1645
    %1936 = vmatprep.subr.bf16.mxu0 %v1650
    %1937 = vmatpush1.bf16.msra.mxu0 %v1649
    %1938 = vmatprep.subr.bf16.mxu0 %v1654
    %1939 = vmatpush1.bf16.msra.mxu0 %v1653
    %1940 = vmatprep.subr.bf16.mxu0 %v1658
    %1941 = vmatpush1.bf16.msra.mxu0 %v1657
    %1942 = vmatprep.mubr.bf16.mxu0 %v1018
    %1943 = vmatmul.mubr.bf16.gmra.mrb[0].mxu0 %v1017
    %v1944 = vpop.f32.mrb[0].mxu0
    %v1945 = vadd.f32 %v1904, %v1944
    %v1946 = vpop.f32.mrb[0].mxu0
    %v1947 = vadd.f32 %v1906, %v1946
    %v1948 = vpop.f32.mrb[0].mxu0
    %v1949 = vpop.f32.mrb[0].mxu0
    %1950 = vdwg.mxu0
    %v1951 = vmul.f32 %v1863, %v1863
    %v1952 = vmul.f32 %v1865, %v1865
    %v1953 = vmul.f32 %v1945, %v1945
    %v1954 = vmul.f32 %v1947, %v1947
    %v1955 = vadd.f32 %v1951, %v1953
    %v1956 = vadd.f32 %v1952, %v1954
    %v1957 = vld [vmem:[%s6] sm:$0xff]
    %v1958 = vld [vmem:[%s6 + $0x8] sm:$0xff]
    %v1959 = vld [vmem:[%s6 + $0x10] sm:$0xff]
    %v1960 = vld [vmem:[%s6 + $0x18] sm:$0xff]
    %v1961 = vld [vmem:[%s6 + $0x20] sm:$0xff]
    %v1962 = vld [vmem:[%s6 + $0x28] sm:$0xff]
    %v1963 = vld [vmem:[%s6 + $0x30] sm:$0xff]
    %v1964 = vld [vmem:[%s6 + $0x38] sm:$0xff]
    %v1965 = vld [vmem:[%s6 + $0x40] sm:$0xff]
    %v1966 = vld [vmem:[%s6 + $0x48] sm:$0xff]
    %v1967 = vld [vmem:[%s6 + $0x50] sm:$0xff]
    %v1968 = vld [vmem:[%s6 + $0x58] sm:$0xff]
    %v1969 = vld [vmem:[%s6 + $0x60] sm:$0xff]
    %v1970 = vld [vmem:[%s6 + $0x68] sm:$0xff]
    %v1971 = vld [vmem:[%s6 + $0x70] sm:$0xff]
    %v1972 = vld [vmem:[%s6 + $0x78] sm:$0xff]
    %v1973 = vld [vmem:[%s6 + $0x80] sm:$0xff]
    %v1974 = vld [vmem:[%s6 + $0x88] sm:$0xff]
    %v1975 = vld [vmem:[%s6 + $0x90] sm:$0xff]
    %v1976 = vld [vmem:[%s6 + $0x98] sm:$0xff]
    %v1977 = vld [vmem:[%s6 + $0xa0] sm:$0xff]
    %v1978 = vld [vmem:[%s6 + $0xa8] sm:$0xff]
    %v1979 = vld [vmem:[%s6 + $0xb0] sm:$0xff]
    %v1980 = vld [vmem:[%s6 + $0xb8] sm:$0xff]
    %v1981 = vld [vmem:[%s6 + $0xc0] sm:$0xff]
    %v1982 = vld [vmem:[%s6 + $0xc8] sm:$0xff]
    %v1983 = vld [vmem:[%s6 + $0xd0] sm:$0xff]
    %v1984 = vld [vmem:[%s6 + $0xd8] sm:$0xff]
    %v1985 = vld [vmem:[%s6 + $0xe0] sm:$0xff]
    %v1986 = vld [vmem:[%s6 + $0xe8] sm:$0xff]
    %v1987 = vld [vmem:[%s6 + $0xf0] sm:$0xff]
    %v1988 = vld [vmem:[%s6 + $0xf8] sm:$0xff]
    %v1989 = vld [vmem:[%s7] sm:$0x1]
    %v1991 = vlaneseq
    %v1992 = vshrl.u32 %v1991, 7
    %v1993 = vsub.s32 0, %v1992
    %v1994 = vrot.slane %v1989, %v1993
    %1996 = vmatprep.subr.mxu0 0.0
    %1997 = vmatpush1.msra.mxu0 %v1957
    %1998 = vmatprep.subr.mxu0 0.0
    %1999 = vmatpush1.msra.mxu0 %v1958
    %2000 = vmatprep.subr.mxu0 0.0
    %2001 = vmatpush1.msra.mxu0 %v1959
    %2002 = vmatprep.subr.mxu0 0.0
    %2003 = vmatpush1.msra.mxu0 %v1960
    %2004 = vmatprep.subr.mxu0 0.0
    %2005 = vmatpush1.msra.mxu0 %v1961
    %2006 = vmatprep.subr.mxu0 0.0
    %2007 = vmatpush1.msra.mxu0 %v1962
    %2008 = vmatprep.subr.mxu0 0.0
    %2009 = vmatpush1.msra.mxu0 %v1963
    %2010 = vmatprep.subr.mxu0 0.0
    %2011 = vmatpush1.msra.mxu0 %v1964
    %2012 = vmatprep.subr.mxu0 0.0
    %2013 = vmatpush1.msra.mxu0 %v1965
    %2014 = vmatprep.subr.mxu0 0.0
    %2015 = vmatpush1.msra.mxu0 %v1966
    %2016 = vmatprep.subr.mxu0 0.0
    %2017 = vmatpush1.msra.mxu0 %v1967
    %2018 = vmatprep.subr.mxu0 0.0
    %2019 = vmatpush1.msra.mxu0 %v1968
    %2020 = vmatprep.subr.mxu0 0.0
    %2021 = vmatpush1.msra.mxu0 %v1969
    %2022 = vmatprep.subr.mxu0 0.0
    %2023 = vmatpush1.msra.mxu0 %v1970
    %2024 = vmatprep.subr.mxu0 0.0
    %2025 = vmatpush1.msra.mxu0 %v1971
    %2026 = vmatprep.subr.mxu0 0.0
    %2027 = vmatpush1.msra.mxu0 %v1972
    %2028 = vmatprep.subr.mxu0 0.0
    %2029 = vmatpush1.msra.mxu0 %v1973
    %2030 = vmatprep.subr.mxu0 0.0
    %2031 = vmatpush1.msra.mxu0 %v1974
    %2032 = vmatprep.subr.mxu0 0.0
    %2033 = vmatpush1.msra.mxu0 %v1975
    %2034 = vmatprep.subr.mxu0 0.0
    %2035 = vmatpush1.msra.mxu0 %v1976
    %2036 = vmatprep.subr.mxu0 0.0
    %2037 = vmatpush1.msra.mxu0 %v1977
    %2038 = vmatprep.subr.mxu0 0.0
    %2039 = vmatpush1.msra.mxu0 %v1978
    %2040 = vmatprep.subr.mxu0 0.0
    %2041 = vmatpush1.msra.mxu0 %v1979
    %2042 = vmatprep.subr.mxu0 0.0
    %2043 = vmatpush1.msra.mxu0 %v1980
    %2044 = vmatprep.subr.mxu0 0.0
    %2045 = vmatpush1.msra.mxu0 %v1981
    %2046 = vmatprep.subr.mxu0 0.0
    %2047 = vmatpush1.msra.mxu0 %v1982
    %2048 = vmatprep.subr.mxu0 0.0
    %2049 = vmatpush1.msra.mxu0 %v1983
    %2050 = vmatprep.subr.mxu0 0.0
    %2051 = vmatpush1.msra.mxu0 %v1984
    %2052 = vmatprep.subr.mxu0 0.0
    %2053 = vmatpush1.msra.mxu0 %v1985
    %2054 = vmatprep.subr.mxu0 0.0
    %2055 = vmatpush1.msra.mxu0 %v1986
    %2056 = vmatprep.subr.mxu0 0.0
    %2057 = vmatpush1.msra.mxu0 %v1987
    %2058 = vmatprep.subr.mxu0 0.0
    %2059 = vmatpush1.msra.mxu0 %v1988
    %2060 = vmatprep.mubr.f32.mxu0 %v1956
    %2061 = vmatmul.mubr.f32.gmra.mrb[0].mxu0 %v1955
    %v2062 = vpop.f32.mrb[0].mxu0
    %v2063 = vadd.f32 %v1994, %v2062
    %v2064 = vpop.f32.mrb[0].mxu0
    %2065 = vdwg.mxu0
    %2066 = vmax.xlane.f32.xlu0 %v2063
    %v2067 = vpop.xlane.xlu0 %2066
    %v2068 = vsub.f32 %v2063, %v2067
    %v2069 = vmul.f32 %v2068, 1.442695
    %v2070 = vpow.pop %v2069
    %2071 = vadd.xlane.f32.xlu0 %v2070
    %v2072 = vpop.xlane.xlu0 %2071
    %v2073 = vrcp.pop %v2072
    %v2074 = vmul.f32 %v2070, %v2073
    %2075 = vst [vmem:[%s9] sm:$0xff] %v2074
    // Predicated region
    $region42: #{quantum_conv_net_forward.1} parent=1 // pred_check
      _
    $region43: #{quantum_conv_net_forward.1} parent=1 // pred_check_branch
      %2077 = sbr.rel (0) target = $region45
    $region44: #{quantum_conv_net_forward.1} parent=1 // pred_region
      _
    $region45: #{quantum_conv_net_forward.1} parent=1 // pred_fallthru
      _
    // Predicated region
    $region46: #{quantum_conv_net_forward.1} parent=1 // pred_check
      _
    $region47: #{quantum_conv_net_forward.1} parent=1 // pred_check_branch
      %2079 = sbr.rel (0) target = $region49
    $region48: #{quantum_conv_net_forward.1} parent=1 // pred_region
      _
    $region49: #{quantum_conv_net_forward.1} parent=1 // pred_fallthru
      _
    %2080 = vsyncpa [#allocation3], 1

</llo_original>
